<compile_context>
chip_gen: v5e
topology: v5e:2x2
jax: 0.10.0
libtpu: 0.0.40
codegen_flags: <defaults>
</compile_context>

<pallas_src>
import math

import jax
import jax.numpy as jnp
from jax.experimental import pallas as pl
from jax.experimental.pallas import tpu as pltpu

LANE = 128


def _round_up(n, m):
    return (n + m - 1) // m * m


def mlp_kernel(x_ref,
               w1_ref, b1_ref,
               w2_ref, b2_ref,
               w3_ref, b3_ref,
               w4_ref, b4_ref,
               w5_ref, b5_ref,
               o_ref):
    """Fused fc1..fc4 (+ReLU) and fc5 on one (tile_b, d_in) batch tile.

    W1 has its true in-dim (matches x); intermediate feature dims are
    zero-padded to 128 lanes so layers 2..5 run on clean 128-wide MXU tiles;
    W5's out-dim is the true 2, so the final store is exactly the module's
    output.  Everything stays f32 (matmul f32 accumulate, VPU bias/ReLU f32).
    """
    def layer(h, w_ref, b_ref, relu):
        acc = jnp.dot(h, w_ref[...],
                      preferred_element_type=jnp.float32,
                      precision=jax.lax.Precision.HIGHEST)
        acc = acc + b_ref[...]
        return jnp.maximum(acc, 0.0) if relu else acc

    h = x_ref[...]
    h = layer(h, w1_ref, b1_ref, True)
    h = layer(h, w2_ref, b2_ref, True)
    h = layer(h, w3_ref, b3_ref, True)
    h = layer(h, w4_ref, b4_ref, True)
    o_ref[...] = layer(h, w5_ref, b5_ref, False)


def _pick_tiling(B, tile_b_max=1024):
    """Pick (tile_b, B_pad) with tile_b a multiple of 8, tile_b <= tile_b_max,
    >= 2 grid steps when there is enough work (v7x: 2 TCs on the parallel axis),
    and minimal batch padding (B_pad = n_tiles * tile_b >= B)."""
    B8 = _round_up(B, 8)
    if B8 <= 8:
        return B8, B8
    n_tiles = max(2, pl.cdiv(B8, tile_b_max))
    tile_b = _round_up(pl.cdiv(B8, n_tiles), 8)
    return tile_b, n_tiles * tile_b


def nn_forward(x, params, *, tile_b_max=1024):
    """x: (B, num_inputs) f32.  params: list of (W, b) with W shape (in, out)."""
    B, d_in = x.shape
    n_layers = len(params)
    out_dim = params[-1][0].shape[1]

    tile_b, B_pad = _pick_tiling(B, tile_b_max)
    if B_pad != B:
        # Only the batch dim is padded (feature dim stays at d_in).
        x = jnp.pad(x, ((0, B_pad - B), (0, 0)))

    args = [x]
    in_specs = [pl.BlockSpec((tile_b, d_in), lambda i: (i, 0))]
    wb_bytes = 0
    for li, (w, b) in enumerate(params):
        di, do = w.shape
        # First layer keeps its true in-dim (matches unpadded x); last layer
        # keeps its true out-dim (matches the 2-wide output).  Intermediate
        # dims are zero-padded to 128 lanes (zeros contribute nothing).
        di_p = di if li == 0 else _round_up(di, LANE)
        do_p = do if li == n_layers - 1 else _round_up(do, LANE)
        w_p = jnp.zeros((di_p, do_p), jnp.float32).at[:di, :do].set(w)
        b_p = jnp.zeros((1, do_p), jnp.float32).at[0, :do].set(b)
        args += [w_p, b_p]
        # Constant index_map -> block is loop-invariant; Pallas keeps it
        # resident in VMEM across the batch grid.
        in_specs += [pl.BlockSpec((di_p, do_p), lambda i: (0, 0)),
                     pl.BlockSpec((1, do_p), lambda i: (0, 0))]
        wb_bytes += (w_p.size + b_p.size) * 4

    # Cost hint from the *real* layer dims (not padded).
    dims = [d_in] + [w.shape[1] for (w, _) in params]
    flops = 2 * B_pad * sum(a * b for a, b in zip(dims[:-1], dims[1:]))
    bytes_accessed = B_pad * d_in * 4 + wb_bytes + B_pad * out_dim * 4

    out = pl.pallas_call(
        mlp_kernel,
        out_shape=jax.ShapeDtypeStruct((B_pad, out_dim), jnp.float32),
        grid=(B_pad // tile_b,),
        in_specs=in_specs,
        out_specs=pl.BlockSpec((tile_b, out_dim), lambda i: (i, 0)),
        compiler_params=pltpu.CompilerParams(
            # Batch tiles are independent -> shard across both TCs on v7x.
            dimension_semantics=("parallel",)),
        cost_estimate=pl.CostEstimate(
            flops=flops, transcendentals=0, bytes_accessed=bytes_accessed),
    )(*args)

    return out[:B] if B_pad != B else out


def init_params(num_inputs=78, key=jax.random.PRNGKey(0)):
    if num_inputs >= 64:
        dims = [num_inputs, 96, 64, 32, 8, 2]
    elif num_inputs >= 24:
        dims = [num_inputs, 72, 48, 24, 8, 2]
    else:
        raise ValueError('Low amount of inputs for neural network: ', num_inputs)

    params = []
    keys = jax.random.split(key, len(dims) - 1)
    for k, fan_in, fan_out in zip(keys, dims[:-1], dims[1:]):
        # matches nn.init.normal_(weight, 0.0, 1/sqrt(FC_in)), bias = 0
        w = jax.random.normal(k, (fan_in, fan_out), dtype=jnp.float32) / math.sqrt(fan_in)
        b = jnp.zeros((fan_out,), dtype=jnp.float32)
        params.append((w, b))
    return params


def reference_forward(x, params):
    # True f32 forward pass (mirrors the f32 PyTorch nn.Linear numerics).
    h = x
    for i, (w, b) in enumerate(params):
        h = jnp.dot(h, w, precision=jax.lax.Precision.HIGHEST) + b
        if i < len(params) - 1:
            h = jnp.maximum(h, 0.0)
    return h


if __name__ == "__main__":
    num_inputs = 78

    key = jax.random.PRNGKey(0)
    k_x, k_p, k_x2 = jax.random.split(key, 3)
    params = init_params(num_inputs, k_p)

    # Small batch (original module usage): single 8-row tile.
    x = jax.random.normal(k_x, (8, num_inputs), dtype=jnp.float32)
    out = jax.block_until_ready(nn_forward(x, params))
    ref = reference_forward(x, params)
    assert out.shape == (8, 2)
    assert jnp.allclose(out, ref, atol=1e-3, rtol=1e-3), "mismatch vs reference (B=8)"

    # Larger batch exercising the multi-tile parallel grid (2 x 192-row tiles,
    # zero batch padding).
    x2 = jax.random.normal(k_x2, (384, num_inputs), dtype=jnp.float32)
    out2 = jax.block_until_ready(nn_forward(x2, params))
    ref2 = reference_forward(x2, params)
    assert out2.shape == (384, 2)
    assert jnp.allclose(out2, ref2, atol=1e-3, rtol=1e-3), "mismatch vs reference (B=384)"

    print("KERNEL_OK")
</pallas_src>

<mosaic_0001>
module attributes {stable_mosaic.version = 11 : i64} {
  func.func @mlp_kernel(%arg0: i32, %arg1: memref<8x78xf32, #tpu.memory_space<vmem>>, %arg2: memref<78x128xf32, #tpu.memory_space<vmem>>, %arg3: memref<1x128xf32, #tpu.memory_space<vmem>>, %arg4: memref<128x128xf32, #tpu.memory_space<vmem>>, %arg5: memref<1x128xf32, #tpu.memory_space<vmem>>, %arg6: memref<128x128xf32, #tpu.memory_space<vmem>>, %arg7: memref<1x128xf32, #tpu.memory_space<vmem>>, %arg8: memref<128x128xf32, #tpu.memory_space<vmem>>, %arg9: memref<1x128xf32, #tpu.memory_space<vmem>>, %arg10: memref<128x2xf32, #tpu.memory_space<vmem>>, %arg11: memref<1x2xf32, #tpu.memory_space<vmem>>, %arg12: memref<8x2xf32, #tpu.memory_space<vmem>>) attributes {dimension_semantics = [#tpu.dimension_semantics<parallel>], iteration_bounds = array<i64: 1>, scalar_prefetch = 0 : i64, scratch_operands = 0 : i64, tpu.core_type = #tpu.core_type<tc>, window_params = [{transform_indices = @transform_0, window_bounds = array<i64: 8, 78>}, {pipeline_mode = #tpu.pipeline_mode<synchronous>, transform_indices = @transform_1, window_bounds = array<i64: 78, 128>}, {pipeline_mode = #tpu.pipeline_mode<synchronous>, transform_indices = @transform_2, window_bounds = array<i64: 1, 128>}, {pipeline_mode = #tpu.pipeline_mode<synchronous>, transform_indices = @transform_3, window_bounds = array<i64: 128, 128>}, {pipeline_mode = #tpu.pipeline_mode<synchronous>, transform_indices = @transform_4, window_bounds = array<i64: 1, 128>}, {pipeline_mode = #tpu.pipeline_mode<synchronous>, transform_indices = @transform_5, window_bounds = array<i64: 128, 128>}, {pipeline_mode = #tpu.pipeline_mode<synchronous>, transform_indices = @transform_6, window_bounds = array<i64: 1, 128>}, {pipeline_mode = #tpu.pipeline_mode<synchronous>, transform_indices = @transform_7, window_bounds = array<i64: 128, 128>}, {pipeline_mode = #tpu.pipeline_mode<synchronous>, transform_indices = @transform_8, window_bounds = array<i64: 1, 128>}, {pipeline_mode = #tpu.pipeline_mode<synchronous>, transform_indices = @transform_9, window_bounds = array<i64: 128, 2>}, {pipeline_mode = #tpu.pipeline_mode<synchronous>, transform_indices = @transform_10, window_bounds = array<i64: 1, 2>}, {transform_indices = @transform_11, window_bounds = array<i64: 8, 2>}]} {
    %c0 = arith.constant 0 : index
    %c0_0 = arith.constant 0 : index
    %0 = vector.load %arg1[%c0, %c0_0] : memref<8x78xf32, #tpu.memory_space<vmem>>, vector<8x78xf32>
    %c0_1 = arith.constant 0 : index
    %c0_2 = arith.constant 0 : index
    %1 = vector.load %arg2[%c0_1, %c0_2] : memref<78x128xf32, #tpu.memory_space<vmem>>, vector<78x128xf32>
    %cst = arith.constant dense<0.000000e+00> : vector<8x128xf32>
    %2 = tpu.matmul %0, %1, %cst {dimension_numbers = #tpu.dot_dimension_numbers<[1], [0], [0], [1], [0, 0, 1, 1], [], []>, precision = #tpu.contract_precision<fp32>} : vector<8x78xf32>, vector<78x128xf32>, vector<8x128xf32> -> vector<8x128xf32>
    %c0_3 = arith.constant 0 : index
    %c0_4 = arith.constant 0 : index
    %3 = vector.load %arg3[%c0_3, %c0_4] : memref<1x128xf32, #tpu.memory_space<vmem>>, vector<1x128xf32>
    %4 = vector.broadcast %3 : vector<1x128xf32> to vector<8x128xf32>
    %5 = arith.addf %2, %4 : vector<8x128xf32>
    %cst_5 = arith.constant 0.000000e+00 : f32
    %6 = vector.broadcast %cst_5 : f32 to vector<8x128xf32>
    %7 = arith.maximumf %5, %6 : vector<8x128xf32>
    %c0_6 = arith.constant 0 : index
    %c0_7 = arith.constant 0 : index
    %8 = vector.load %arg4[%c0_6, %c0_7] : memref<128x128xf32, #tpu.memory_space<vmem>>, vector<128x128xf32>
    %cst_8 = arith.constant dense<0.000000e+00> : vector<8x128xf32>
    %9 = tpu.matmul %7, %8, %cst_8 {dimension_numbers = #tpu.dot_dimension_numbers<[1], [0], [0], [1], [0, 0, 1, 1], [], []>, precision = #tpu.contract_precision<fp32>} : vector<8x128xf32>, vector<128x128xf32>, vector<8x128xf32> -> vector<8x128xf32>
    %c0_9 = arith.constant 0 : index
    %c0_10 = arith.constant 0 : index
    %10 = vector.load %arg5[%c0_9, %c0_10] : memref<1x128xf32, #tpu.memory_space<vmem>>, vector<1x128xf32>
    %11 = vector.broadcast %10 : vector<1x128xf32> to vector<8x128xf32>
    %12 = arith.addf %9, %11 : vector<8x128xf32>
    %cst_11 = arith.constant 0.000000e+00 : f32
    %13 = vector.broadcast %cst_11 : f32 to vector<8x128xf32>
    %14 = arith.maximumf %12, %13 : vector<8x128xf32>
    %c0_12 = arith.constant 0 : index
    %c0_13 = arith.constant 0 : index
    %15 = vector.load %arg6[%c0_12, %c0_13] : memref<128x128xf32, #tpu.memory_space<vmem>>, vector<128x128xf32>
    %cst_14 = arith.constant dense<0.000000e+00> : vector<8x128xf32>
    %16 = tpu.matmul %14, %15, %cst_14 {dimension_numbers = #tpu.dot_dimension_numbers<[1], [0], [0], [1], [0, 0, 1, 1], [], []>, precision = #tpu.contract_precision<fp32>} : vector<8x128xf32>, vector<128x128xf32>, vector<8x128xf32> -> vector<8x128xf32>
    %c0_15 = arith.constant 0 : index
    %c0_16 = arith.constant 0 : index
    %17 = vector.load %arg7[%c0_15, %c0_16] : memref<1x128xf32, #tpu.memory_space<vmem>>, vector<1x128xf32>
    %18 = vector.broadcast %17 : vector<1x128xf32> to vector<8x128xf32>
    %19 = arith.addf %16, %18 : vector<8x128xf32>
    %cst_17 = arith.constant 0.000000e+00 : f32
    %20 = vector.broadcast %cst_17 : f32 to vector<8x128xf32>
    %21 = arith.maximumf %19, %20 : vector<8x128xf32>
    %c0_18 = arith.constant 0 : index
    %c0_19 = arith.constant 0 : index
    %22 = vector.load %arg8[%c0_18, %c0_19] : memref<128x128xf32, #tpu.memory_space<vmem>>, vector<128x128xf32>
    %cst_20 = arith.constant dense<0.000000e+00> : vector<8x128xf32>
    %23 = tpu.matmul %21, %22, %cst_20 {dimension_numbers = #tpu.dot_dimension_numbers<[1], [0], [0], [1], [0, 0, 1, 1], [], []>, precision = #tpu.contract_precision<fp32>} : vector<8x128xf32>, vector<128x128xf32>, vector<8x128xf32> -> vector<8x128xf32>
    %c0_21 = arith.constant 0 : index
    %c0_22 = arith.constant 0 : index
    %24 = vector.load %arg9[%c0_21, %c0_22] : memref<1x128xf32, #tpu.memory_space<vmem>>, vector<1x128xf32>
    %25 = vector.broadcast %24 : vector<1x128xf32> to vector<8x128xf32>
    %26 = arith.addf %23, %25 : vector<8x128xf32>
    %cst_23 = arith.constant 0.000000e+00 : f32
    %27 = vector.broadcast %cst_23 : f32 to vector<8x128xf32>
    %28 = arith.maximumf %26, %27 : vector<8x128xf32>
    %c0_24 = arith.constant 0 : index
    %c0_25 = arith.constant 0 : index
    %29 = vector.load %arg10[%c0_24, %c0_25] : memref<128x2xf32, #tpu.memory_space<vmem>>, vector<128x2xf32>
    %cst_26 = arith.constant dense<0.000000e+00> : vector<8x2xf32>
    %30 = tpu.matmul %28, %29, %cst_26 {dimension_numbers = #tpu.dot_dimension_numbers<[1], [0], [0], [1], [0, 0, 1, 1], [], []>, precision = #tpu.contract_precision<fp32>} : vector<8x128xf32>, vector<128x2xf32>, vector<8x2xf32> -> vector<8x2xf32>
    %c0_27 = arith.constant 0 : index
    %c0_28 = arith.constant 0 : index
    %31 = vector.load %arg11[%c0_27, %c0_28] : memref<1x2xf32, #tpu.memory_space<vmem>>, vector<1x2xf32>
    %32 = vector.broadcast %31 : vector<1x2xf32> to vector<8x2xf32>
    %33 = arith.addf %30, %32 : vector<8x2xf32>
    %c0_29 = arith.constant 0 : index
    %c0_30 = arith.constant 0 : index
    %34 = vector.load %arg12[%c0_29, %c0_30] : memref<8x2xf32, #tpu.memory_space<vmem>>, vector<8x2xf32>
    tpu.vector_store %arg12[%c0_29, %c0_30], %33 {strides = array<i32>} : memref<8x2xf32, #tpu.memory_space<vmem>>, vector<8x2xf32>,
    return
  }
  func.func @transform_0(%arg0: i32) -> (i32, i32) {
    %c0_i32 = arith.constant 0 : i32
    %c0_i32_0 = arith.constant 0 : i32
    return %arg0, %c0_i32 : i32, i32
  }
  func.func @transform_1(%arg0: i32) -> (i32, i32) {
    %c0_i32 = arith.constant 0 : i32
    %c0_i32_0 = arith.constant 0 : i32
    %c0_i32_1 = arith.constant 0 : i32
    return %c0_i32, %c0_i32_0 : i32, i32
  }
  func.func @transform_2(%arg0: i32) -> (i32, i32) {
    %c0_i32 = arith.constant 0 : i32
    %c0_i32_0 = arith.constant 0 : i32
    %c0_i32_1 = arith.constant 0 : i32
    return %c0_i32, %c0_i32_0 : i32, i32
  }
  func.func @transform_3(%arg0: i32) -> (i32, i32) {
    %c0_i32 = arith.constant 0 : i32
    %c0_i32_0 = arith.constant 0 : i32
    %c0_i32_1 = arith.constant 0 : i32
    return %c0_i32, %c0_i32_0 : i32, i32
  }
  func.func @transform_4(%arg0: i32) -> (i32, i32) {
    %c0_i32 = arith.constant 0 : i32
    %c0_i32_0 = arith.constant 0 : i32
    %c0_i32_1 = arith.constant 0 : i32
    return %c0_i32, %c0_i32_0 : i32, i32
  }
  func.func @transform_5(%arg0: i32) -> (i32, i32) {
    %c0_i32 = arith.constant 0 : i32
    %c0_i32_0 = arith.constant 0 : i32
    %c0_i32_1 = arith.constant 0 : i32
    return %c0_i32, %c0_i32_0 : i32, i32
  }
  func.func @transform_6(%arg0: i32) -> (i32, i32) {
    %c0_i32 = arith.constant 0 : i32
    %c0_i32_0 = arith.constant 0 : i32
    %c0_i32_1 = arith.constant 0 : i32
    return %c0_i32, %c0_i32_0 : i32, i32
  }
  func.func @transform_7(%arg0: i32) -> (i32, i32) {
    %c0_i32 = arith.constant 0 : i32
    %c0_i32_0 = arith.constant 0 : i32
    %c0_i32_1 = arith.constant 0 : i32
    return %c0_i32, %c0_i32_0 : i32, i32
  }
  func.func @transform_8(%arg0: i32) -> (i32, i32) {
    %c0_i32 = arith.constant 0 : i32
    %c0_i32_0 = arith.constant 0 : i32
    %c0_i32_1 = arith.constant 0 : i32
    return %c0_i32, %c0_i32_0 : i32, i32
  }
  func.func @transform_9(%arg0: i32) -> (i32, i32) {
    %c0_i32 = arith.constant 0 : i32
    %c0_i32_0 = arith.constant 0 : i32
    %c0_i32_1 = arith.constant 0 : i32
    return %c0_i32, %c0_i32_0 : i32, i32
  }
  func.func @transform_10(%arg0: i32) -> (i32, i32) {
    %c0_i32 = arith.constant 0 : i32
    %c0_i32_0 = arith.constant 0 : i32
    %c0_i32_1 = arith.constant 0 : i32
    return %c0_i32, %c0_i32_0 : i32, i32
  }
  func.func @transform_11(%arg0: i32) -> (i32, i32) {
    %c0_i32 = arith.constant 0 : i32
    %c0_i32_0 = arith.constant 0 : i32
    return %arg0, %c0_i32 : i32, i32
  }
}

</mosaic_0001>

<llo_original>
// kernel: tpu_custom_call.1
$region0: #{tpu_custom_call.1}
  #allocation0 [shape = 'u32[]', space=smem, size = 0x4, offset = 0x4, fixed_abs, tag = 'smem constant byte address 0x4 - core index']
  #allocation1 [shape = 'u32[72,128]{1,0:T(1,128)}', space=vmem, size = 0x9000, scoped, tag = 'internal scratch']
  %s0 = inlined_call_operand.hbm [shape: f32[8,78], index: 0, kind: input, shape index: {}]
  %s1 = inlined_call_operand.hbm [shape: f32[78,128], index: 1, kind: input, shape index: {}]
  %s2 = inlined_call_operand.vmem [shape: f32[1,128], index: 2, kind: input, shape index: {}]
  %s3 = inlined_call_operand.vmem [shape: f32[128,128], index: 3, kind: input, shape index: {}]
  %s4 = inlined_call_operand.vmem [shape: f32[1,128], index: 4, kind: input, shape index: {}]
  %s5 = inlined_call_operand.hbm [shape: f32[128,128], index: 5, kind: input, shape index: {}]
  %s6 = inlined_call_operand.vmem [shape: f32[1,128], index: 6, kind: input, shape index: {}]
  %s7 = inlined_call_operand.hbm [shape: f32[128,128], index: 7, kind: input, shape index: {}]
  %s8 = inlined_call_operand.vmem [shape: f32[1,128], index: 8, kind: input, shape index: {}]
  %s9 = inlined_call_operand.vmem [shape: f32[128,2], index: 9, kind: input, shape index: {}]
  %s10 = inlined_call_operand.vmem [shape: f32[1,2], index: 10, kind: input, shape index: {}]
  %s11 = inlined_call_operand.vmem [shape: f32[8,2], index: 11, kind: output, shape index: {}]
  %s12 = sld [smem:[#allocation0]]
  $region70: #{tpu_custom_call.1} parent=0
    _
  %s14 = ssub.s32 1, %s12
  %s15 = scalar_select 0, %s14, %s12
  $region1: #{tpu_custom_call.1} parent=0
    #allocation2 [shape = 'u8[4096]{0}', space=vmem, size = 0x1000, scoped, tag = 'input window, operand 0, single buffered']
    #allocation3 [shape = 's32[1]{0}', space=sflag, size = 0x4, scoped, tag = 'scoped memory for tpu_custom_call.1']
    #allocation4 [shape = 'u8[40960]{0}', space=vmem, size = 0xa000, scoped, tag = 'input window, operand 1, single buffered']
    #allocation5 [shape = 's32[1]{0}', space=sflag, size = 0x4, scoped, tag = 'scoped memory for tpu_custom_call.1']
    #allocation6 [shape = 'u8[65536]{0}', space=vmem, size = 0x10000, scoped, tag = 'input window, operand 5, single buffered']
    #allocation7 [shape = 'u8[65536]{0}', space=vmem, size = 0x10000, scoped, tag = 'input window, operand 7, single buffered']
    #allocation8 [shape = 's32[1]{0}', space=sflag, size = 0x4, scoped, tag = 'scoped memory for tpu_custom_call.1']
    %16 = vsyncpa [#allocation3], 0
    %17 = vsyncpa [#allocation5], 0
    %18 = vsyncpa [#allocation8], 0
    // Predicated region
    $region2: #{tpu_custom_call.1} parent=1 // pred_check
      _
    $region3: #{tpu_custom_call.1} parent=1 // pred_check_branch
      %20 = sbr.rel (0) target = $region5
    $region4: #{tpu_custom_call.1} parent=1 // pred_region
      %22 = vsyncadd [#allocation3], 0
      %s24 = sshll.u32 %s0, 4
      %s25 = int_to_ptr.hbm [resolvable:$true] %s24
      %s26 = sshll.u32 [#allocation2], 4
      %s27 = int_to_ptr.vmem [resolvable:$true] %s26
      %29 = dma.hbm_to_vmem [thread:$0]  %s25, 128, %s27, [#allocation3]
    $region5: #{tpu_custom_call.1} parent=1 // pred_fallthru
      _
    // Predicated region
    $region6: #{tpu_custom_call.1} parent=1 // pred_check
      _
    $region7: #{tpu_custom_call.1} parent=1 // pred_check_branch
      %31 = sbr.rel (0) target = $region9
    $region8: #{tpu_custom_call.1} parent=1 // pred_region
      %33 = vsyncadd [#allocation5], 0
      %s34 = sshll.u32 %s1, 4
      %s35 = int_to_ptr.hbm [resolvable:$true] %s34
      %s36 = sshll.u32 [#allocation4], 4
      %s37 = int_to_ptr.vmem [resolvable:$true] %s36
      %42 = dma.hbm_to_vmem [thread:$0]  %s35, 1280, %s37, [#allocation5], 128, 128, 8
    $region9: #{tpu_custom_call.1} parent=1 // pred_fallthru
      _
    // Predicated region
    $region10: #{tpu_custom_call.1} parent=1 // pred_check
      _
    $region11: #{tpu_custom_call.1} parent=1 // pred_check_branch
      %44 = sbr.rel (0) target = $region13
    $region12: #{tpu_custom_call.1} parent=1 // pred_region
      _
    $region13: #{tpu_custom_call.1} parent=1 // pred_fallthru
      _
    // Predicated region
    $region14: #{tpu_custom_call.1} parent=1 // pred_check
      _
    $region15: #{tpu_custom_call.1} parent=1 // pred_check_branch
      %46 = sbr.rel (0) target = $region17
    $region16: #{tpu_custom_call.1} parent=1 // pred_region
      _
    $region17: #{tpu_custom_call.1} parent=1 // pred_fallthru
      _
    // Predicated region
    $region18: #{tpu_custom_call.1} parent=1 // pred_check
      _
    $region19: #{tpu_custom_call.1} parent=1 // pred_check_branch
      %48 = sbr.rel (0) target = $region21
    $region20: #{tpu_custom_call.1} parent=1 // pred_region
      _
    $region21: #{tpu_custom_call.1} parent=1 // pred_fallthru
      _
    // Predicated region
    $region22: #{tpu_custom_call.1} parent=1 // pred_check
      _
    $region23: #{tpu_custom_call.1} parent=1 // pred_check_branch
      %50 = sbr.rel (0) target = $region25
    $region24: #{tpu_custom_call.1} parent=1 // pred_region
      %52 = vsyncadd [#allocation5], 0
      %s53 = sshll.u32 %s5, 4
      %s54 = int_to_ptr.hbm [resolvable:$true] %s53
      %s55 = sshll.u32 [#allocation6], 4
      %s56 = int_to_ptr.vmem [resolvable:$true] %s55
      %61 = dma.hbm_to_vmem [thread:$0]  %s54, 2048, %s56, [#allocation5], 128, 128, 8
    $region25: #{tpu_custom_call.1} parent=1 // pred_fallthru
      _
    // Predicated region
    $region26: #{tpu_custom_call.1} parent=1 // pred_check
      _
    $region27: #{tpu_custom_call.1} parent=1 // pred_check_branch
      %63 = sbr.rel (0) target = $region29
    $region28: #{tpu_custom_call.1} parent=1 // pred_region
      _
    $region29: #{tpu_custom_call.1} parent=1 // pred_fallthru
      _
    // Predicated region
    $region30: #{tpu_custom_call.1} parent=1 // pred_check
      _
    $region31: #{tpu_custom_call.1} parent=1 // pred_check_branch
      %65 = sbr.rel (0) target = $region33
    $region32: #{tpu_custom_call.1} parent=1 // pred_region
      %67 = vsyncadd [#allocation8], 0
      %s68 = sshll.u32 %s7, 4
      %s69 = int_to_ptr.hbm [resolvable:$true] %s68
      %s70 = sshll.u32 [#allocation7], 4
      %s71 = int_to_ptr.vmem [resolvable:$true] %s70
      %76 = dma.hbm_to_vmem [thread:$0]  %s69, 2048, %s71, [#allocation8], 128, 128, 8
    $region33: #{tpu_custom_call.1} parent=1 // pred_fallthru
      _
    // Predicated region
    $region34: #{tpu_custom_call.1} parent=1 // pred_check
      _
    $region35: #{tpu_custom_call.1} parent=1 // pred_check_branch
      %78 = sbr.rel (0) target = $region37
    $region36: #{tpu_custom_call.1} parent=1 // pred_region
      _
    $region37: #{tpu_custom_call.1} parent=1 // pred_fallthru
      _
    // Predicated region
    $region38: #{tpu_custom_call.1} parent=1 // pred_check
      _
    $region39: #{tpu_custom_call.1} parent=1 // pred_check_branch
      %80 = sbr.rel (0) target = $region41
    $region40: #{tpu_custom_call.1} parent=1 // pred_region
      _
    $region41: #{tpu_custom_call.1} parent=1 // pred_fallthru
      _
    // Predicated region
    $region42: #{tpu_custom_call.1} parent=1 // pred_check
      _
    $region43: #{tpu_custom_call.1} parent=1 // pred_check_branch
      %82 = sbr.rel (0) target = $region45
    $region44: #{tpu_custom_call.1} parent=1 // pred_region
      _
    $region45: #{tpu_custom_call.1} parent=1 // pred_fallthru
      _
    // Predicated region
    $region46: #{tpu_custom_call.1} parent=1 // pred_check
      _
    $region47: #{tpu_custom_call.1} parent=1 // pred_check_branch
      %84 = sbr.rel (0) target = $region49
    $region48: #{tpu_custom_call.1} parent=1 // pred_region
      %86 = dma.done [#allocation3], 128
    $region49: #{tpu_custom_call.1} parent=1 // pred_fallthru
      _
    // Predicated region
    $region50: #{tpu_custom_call.1} parent=1 // pred_check
      _
    $region51: #{tpu_custom_call.1} parent=1 // pred_check_branch
      %88 = sbr.rel (0) target = $region53
    $region52: #{tpu_custom_call.1} parent=1 // pred_region
      %90 = dma.done [#allocation5], 1280
    $region53: #{tpu_custom_call.1} parent=1 // pred_fallthru
      _
    // Predicated region
    $region54: #{tpu_custom_call.1} parent=1 // pred_check
      _
    $region55: #{tpu_custom_call.1} parent=1 // pred_check_branch
      %92 = sbr.rel (0) target = $region57
    $region56: #{tpu_custom_call.1} parent=1 // pred_region
      %94 = dma.done [#allocation5], 2048
    $region57: #{tpu_custom_call.1} parent=1 // pred_fallthru
      _
    // Predicated region
    $region58: #{tpu_custom_call.1} parent=1 // pred_check
      _
    $region59: #{tpu_custom_call.1} parent=1 // pred_check_branch
      %96 = sbr.rel (0) target = $region61
    $region60: #{tpu_custom_call.1} parent=1 // pred_region
      %98 = dma.done [#allocation8], 2048
    $region61: #{tpu_custom_call.1} parent=1 // pred_fallthru
      _
    %v99 = vld [vmem:[#allocation2] sm:$0xff]
    %v100 = vld [vmem:[#allocation4] sm:$0xff]
    %v101 = vld [vmem:[#allocation4 + $0x8] sm:$0xff]
    %v102 = vld [vmem:[#allocation4 + $0x10] sm:$0xff]
    %v103 = vld [vmem:[#allocation4 + $0x18] sm:$0xff]
    %v104 = vld [vmem:[#allocation4 + $0x20] sm:$0xff]
    %v105 = vld [vmem:[#allocation4 + $0x28] sm:$0xff]
    %v106 = vld [vmem:[#allocation4 + $0x30] sm:$0xff]
    %v107 = vld [vmem:[#allocation4 + $0x38] sm:$0xff]
    %v108 = vld [vmem:[#allocation4 + $0x40] sm:$0xff]
    %v109 = vld [vmem:[#allocation4 + $0x48] sm:$0x3f]
    %v110 = vld [vmem:[%s2] sm:$0x1]
    %v112 = vperm.slane %v110, 0
    %vm114 = vcmask 637952
    %v116 = vsel %vm114, %v99, 0
    %vm118 = vcmask 1045504
    %v120 = vsel %vm118, %v109, 0
    %122 = vmatpush.msra.mxu0 0.0
    %123 = vmatpush.msra.mxu0 0.0
    %124 = vmatpush.msra.mxu0 0.0
    %125 = vmatpush.msra.mxu0 0.0
    %126 = vmatpush.msra.mxu0 0.0
    %127 = vmatpush.msra.mxu0 0.0
    %v128 = vand.u32 %v120, 4294901760
    %129 = vmatpush.msra.mxu0 %v128
    %v130 = vand.u32 %v108, 4294901760
    %131 = vmatpush.msra.mxu0 %v130
    %v132 = vand.u32 %v107, 4294901760
    %133 = vmatpush.msra.mxu0 %v132
    %v134 = vand.u32 %v106, 4294901760
    %135 = vmatpush.msra.mxu0 %v134
    %v136 = vand.u32 %v105, 4294901760
    %137 = vmatpush.msra.mxu0 %v136
    %v138 = vand.u32 %v104, 4294901760
    %139 = vmatpush.msra.mxu0 %v138
    %v140 = vand.u32 %v103, 4294901760
    %141 = vmatpush.msra.mxu0 %v140
    %v142 = vand.u32 %v102, 4294901760
    %143 = vmatpush.msra.mxu0 %v142
    %v144 = vand.u32 %v101, 4294901760
    %145 = vmatpush.msra.mxu0 %v144
    %v146 = vand.u32 %v100, 4294901760
    %147 = vmatpush.msra.mxu0 %v146
    %v148 = vand.u32 %v116, 4294901760
    %v149 = vsub.f32 %v116, %v148
    %v150 = vand.u32 %v149, 4294901760
    %v151 = vsub.f32 %v149, %v150
    %v152 = vand.u32 %v151, 4294901760
    %153 = vmatmul.f32.gmra.mxu0 %v152
    %v154 = vpop.f32.mrf.mxu0
    %v155 = vadd.f32 %v112, %v154
    %156 = vdwg.mxu0
    %157 = vmatpush.msra.mxu0 0.0
    %158 = vmatpush.msra.mxu0 0.0
    %159 = vmatpush.msra.mxu0 0.0
    %160 = vmatpush.msra.mxu0 0.0
    %161 = vmatpush.msra.mxu0 0.0
    %162 = vmatpush.msra.mxu0 0.0
    %v163 = vand.u32 %v120, 4294901760
    %v164 = vsub.f32 %v120, %v163
    %v165 = vand.u32 %v164, 4294901760
    %v166 = vsub.f32 %v164, %v165
    %v167 = vand.u32 %v166, 4294901760
    %168 = vmatpush.msra.mxu0 %v167
    %v169 = vand.u32 %v108, 4294901760
    %v170 = vsub.f32 %v108, %v169
    %v171 = vand.u32 %v170, 4294901760
    %v172 = vsub.f32 %v170, %v171
    %v173 = vand.u32 %v172, 4294901760
    %174 = vmatpush.msra.mxu0 %v173
    %v175 = vand.u32 %v107, 4294901760
    %v176 = vsub.f32 %v107, %v175
    %v177 = vand.u32 %v176, 4294901760
    %v178 = vsub.f32 %v176, %v177
    %v179 = vand.u32 %v178, 4294901760
    %180 = vmatpush.msra.mxu0 %v179
    %v181 = vand.u32 %v106, 4294901760
    %v182 = vsub.f32 %v106, %v181
    %v183 = vand.u32 %v182, 4294901760
    %v184 = vsub.f32 %v182, %v183
    %v185 = vand.u32 %v184, 4294901760
    %186 = vmatpush.msra.mxu0 %v185
    %v187 = vand.u32 %v105, 4294901760
    %v188 = vsub.f32 %v105, %v187
    %v189 = vand.u32 %v188, 4294901760
    %v190 = vsub.f32 %v188, %v189
    %v191 = vand.u32 %v190, 4294901760
    %192 = vmatpush.msra.mxu0 %v191
    %v193 = vand.u32 %v104, 4294901760
    %v194 = vsub.f32 %v104, %v193
    %v195 = vand.u32 %v194, 4294901760
    %v196 = vsub.f32 %v194, %v195
    %v197 = vand.u32 %v196, 4294901760
    %198 = vmatpush.msra.mxu0 %v197
    %v199 = vand.u32 %v103, 4294901760
    %v200 = vsub.f32 %v103, %v199
    %v201 = vand.u32 %v200, 4294901760
    %v202 = vsub.f32 %v200, %v201
    %v203 = vand.u32 %v202, 4294901760
    %204 = vmatpush.msra.mxu0 %v203
    %v205 = vand.u32 %v102, 4294901760
    %v206 = vsub.f32 %v102, %v205
    %v207 = vand.u32 %v206, 4294901760
    %v208 = vsub.f32 %v206, %v207
    %v209 = vand.u32 %v208, 4294901760
    %210 = vmatpush.msra.mxu0 %v209
    %v211 = vand.u32 %v101, 4294901760
    %v212 = vsub.f32 %v101, %v211
    %v213 = vand.u32 %v212, 4294901760
    %v214 = vsub.f32 %v212, %v213
    %v215 = vand.u32 %v214, 4294901760
    %216 = vmatpush.msra.mxu0 %v215
    %v217 = vand.u32 %v100, 4294901760
    %v218 = vsub.f32 %v100, %v217
    %v219 = vand.u32 %v218, 4294901760
    %v220 = vsub.f32 %v218, %v219
    %v221 = vand.u32 %v220, 4294901760
    %222 = vmatpush.msra.mxu0 %v221
    %v223 = vand.u32 %v116, 4294901760
    %224 = vmatmul.f32.gmra.mxu0 %v223
    %v225 = vpop.f32.mrf.mxu0
    %v226 = vadd.f32 %v155, %v225
    %227 = vdwg.mxu0
    %228 = vmatpush.msra.mxu0 0.0
    %229 = vmatpush.msra.mxu0 0.0
    %230 = vmatpush.msra.mxu0 0.0
    %231 = vmatpush.msra.mxu0 0.0
    %232 = vmatpush.msra.mxu0 0.0
    %233 = vmatpush.msra.mxu0 0.0
    %v234 = vand.u32 %v120, 4294901760
    %v235 = vsub.f32 %v120, %v234
    %236 = vmatpush.msra.mxu0 %v235
    %v237 = vand.u32 %v108, 4294901760
    %v238 = vsub.f32 %v108, %v237
    %239 = vmatpush.msra.mxu0 %v238
    %v240 = vand.u32 %v107, 4294901760
    %v241 = vsub.f32 %v107, %v240
    %242 = vmatpush.msra.mxu0 %v241
    %v243 = vand.u32 %v106, 4294901760
    %v244 = vsub.f32 %v106, %v243
    %245 = vmatpush.msra.mxu0 %v244
    %v246 = vand.u32 %v105, 4294901760
    %v247 = vsub.f32 %v105, %v246
    %248 = vmatpush.msra.mxu0 %v247
    %v249 = vand.u32 %v104, 4294901760
    %v250 = vsub.f32 %v104, %v249
    %251 = vmatpush.msra.mxu0 %v250
    %v252 = vand.u32 %v103, 4294901760
    %v253 = vsub.f32 %v103, %v252
    %254 = vmatpush.msra.mxu0 %v253
    %v255 = vand.u32 %v102, 4294901760
    %v256 = vsub.f32 %v102, %v255
    %257 = vmatpush.msra.mxu0 %v256
    %v258 = vand.u32 %v101, 4294901760
    %v259 = vsub.f32 %v101, %v258
    %260 = vmatpush.msra.mxu0 %v259
    %v261 = vand.u32 %v100, 4294901760
    %v262 = vsub.f32 %v100, %v261
    %263 = vmatpush.msra.mxu0 %v262
    %v264 = vand.u32 %v116, 4294901760
    %v265 = vsub.f32 %v116, %v264
    %266 = vmatmul.f32.gmra.mxu0 %v265
    %v267 = vpop.f32.mrf.mxu0
    %v268 = vadd.f32 %v226, %v267
    %269 = vdwg.mxu0
    %270 = vmatpush.msra.mxu0 0.0
    %271 = vmatpush.msra.mxu0 0.0
    %272 = vmatpush.msra.mxu0 0.0
    %273 = vmatpush.msra.mxu0 0.0
    %274 = vmatpush.msra.mxu0 0.0
    %275 = vmatpush.msra.mxu0 0.0
    %v276 = vand.u32 %v120, 4294901760
    %277 = vmatpush.msra.mxu0 %v276
    %v278 = vand.u32 %v108, 4294901760
    %279 = vmatpush.msra.mxu0 %v278
    %v280 = vand.u32 %v107, 4294901760
    %281 = vmatpush.msra.mxu0 %v280
    %v282 = vand.u32 %v106, 4294901760
    %283 = vmatpush.msra.mxu0 %v282
    %v284 = vand.u32 %v105, 4294901760
    %285 = vmatpush.msra.mxu0 %v284
    %v286 = vand.u32 %v104, 4294901760
    %287 = vmatpush.msra.mxu0 %v286
    %v288 = vand.u32 %v103, 4294901760
    %289 = vmatpush.msra.mxu0 %v288
    %v290 = vand.u32 %v102, 4294901760
    %291 = vmatpush.msra.mxu0 %v290
    %v292 = vand.u32 %v101, 4294901760
    %293 = vmatpush.msra.mxu0 %v292
    %v294 = vand.u32 %v100, 4294901760
    %295 = vmatpush.msra.mxu0 %v294
    %v296 = vand.u32 %v116, 4294901760
    %v297 = vsub.f32 %v116, %v296
    %v298 = vand.u32 %v297, 4294901760
    %299 = vmatmul.f32.gmra.mxu0 %v298
    %v300 = vpop.f32.mrf.mxu0
    %v301 = vadd.f32 %v268, %v300
    %302 = vdwg.mxu0
    %303 = vmatpush.msra.mxu0 0.0
    %304 = vmatpush.msra.mxu0 0.0
    %305 = vmatpush.msra.mxu0 0.0
    %306 = vmatpush.msra.mxu0 0.0
    %307 = vmatpush.msra.mxu0 0.0
    %308 = vmatpush.msra.mxu0 0.0
    %v309 = vand.u32 %v120, 4294901760
    %v310 = vsub.f32 %v120, %v309
    %v311 = vand.u32 %v310, 4294901760
    %312 = vmatpush.msra.mxu0 %v311
    %v313 = vand.u32 %v108, 4294901760
    %v314 = vsub.f32 %v108, %v313
    %v315 = vand.u32 %v314, 4294901760
    %316 = vmatpush.msra.mxu0 %v315
    %v317 = vand.u32 %v107, 4294901760
    %v318 = vsub.f32 %v107, %v317
    %v319 = vand.u32 %v318, 4294901760
    %320 = vmatpush.msra.mxu0 %v319
    %v321 = vand.u32 %v106, 4294901760
    %v322 = vsub.f32 %v106, %v321
    %v323 = vand.u32 %v322, 4294901760
    %324 = vmatpush.msra.mxu0 %v323
    %v325 = vand.u32 %v105, 4294901760
    %v326 = vsub.f32 %v105, %v325
    %v327 = vand.u32 %v326, 4294901760
    %328 = vmatpush.msra.mxu0 %v327
    %v329 = vand.u32 %v104, 4294901760
    %v330 = vsub.f32 %v104, %v329
    %v331 = vand.u32 %v330, 4294901760
    %332 = vmatpush.msra.mxu0 %v331
    %v333 = vand.u32 %v103, 4294901760
    %v334 = vsub.f32 %v103, %v333
    %v335 = vand.u32 %v334, 4294901760
    %336 = vmatpush.msra.mxu0 %v335
    %v337 = vand.u32 %v102, 4294901760
    %v338 = vsub.f32 %v102, %v337
    %v339 = vand.u32 %v338, 4294901760
    %340 = vmatpush.msra.mxu0 %v339
    %v341 = vand.u32 %v101, 4294901760
    %v342 = vsub.f32 %v101, %v341
    %v343 = vand.u32 %v342, 4294901760
    %344 = vmatpush.msra.mxu0 %v343
    %v345 = vand.u32 %v100, 4294901760
    %v346 = vsub.f32 %v100, %v345
    %v347 = vand.u32 %v346, 4294901760
    %348 = vmatpush.msra.mxu0 %v347
    %v349 = vand.u32 %v116, 4294901760
    %350 = vmatmul.f32.gmra.mxu0 %v349
    %v351 = vpop.f32.mrf.mxu0
    %v352 = vadd.f32 %v301, %v351
    %353 = vdwg.mxu0
    %354 = vmatpush.msra.mxu0 0.0
    %355 = vmatpush.msra.mxu0 0.0
    %356 = vmatpush.msra.mxu0 0.0
    %357 = vmatpush.msra.mxu0 0.0
    %358 = vmatpush.msra.mxu0 0.0
    %359 = vmatpush.msra.mxu0 0.0
    %v360 = vand.u32 %v120, 4294901760
    %361 = vmatpush.msra.mxu0 %v360
    %v362 = vand.u32 %v108, 4294901760
    %363 = vmatpush.msra.mxu0 %v362
    %v364 = vand.u32 %v107, 4294901760
    %365 = vmatpush.msra.mxu0 %v364
    %v366 = vand.u32 %v106, 4294901760
    %367 = vmatpush.msra.mxu0 %v366
    %v368 = vand.u32 %v105, 4294901760
    %369 = vmatpush.msra.mxu0 %v368
    %v370 = vand.u32 %v104, 4294901760
    %371 = vmatpush.msra.mxu0 %v370
    %v372 = vand.u32 %v103, 4294901760
    %373 = vmatpush.msra.mxu0 %v372
    %v374 = vand.u32 %v102, 4294901760
    %375 = vmatpush.msra.mxu0 %v374
    %v376 = vand.u32 %v101, 4294901760
    %377 = vmatpush.msra.mxu0 %v376
    %v378 = vand.u32 %v100, 4294901760
    %379 = vmatpush.msra.mxu0 %v378
    %v380 = vand.u32 %v116, 4294901760
    %381 = vmatmul.f32.gmra.mxu0 %v380
    %v382 = vpop.f32.mrf.mxu0
    %v383 = vadd.f32 %v352, %v382
    %384 = vdwg.mxu0
    %v385 = vmax.f32 %v383, 0.0
    %v386 = vld [vmem:[%s3] sm:$0xff]
    %v387 = vld [vmem:[%s3 + $0x8] sm:$0xff]
    %v388 = vld [vmem:[%s3 + $0x10] sm:$0xff]
    %v389 = vld [vmem:[%s3 + $0x18] sm:$0xff]
    %v390 = vld [vmem:[%s3 + $0x20] sm:$0xff]
    %v391 = vld [vmem:[%s3 + $0x28] sm:$0xff]
    %v392 = vld [vmem:[%s3 + $0x30] sm:$0xff]
    %v393 = vld [vmem:[%s3 + $0x38] sm:$0xff]
    %v394 = vld [vmem:[%s3 + $0x40] sm:$0xff]
    %v395 = vld [vmem:[%s3 + $0x48] sm:$0xff]
    %v396 = vld [vmem:[%s3 + $0x50] sm:$0xff]
    %v397 = vld [vmem:[%s3 + $0x58] sm:$0xff]
    %v398 = vld [vmem:[%s3 + $0x60] sm:$0xff]
    %v399 = vld [vmem:[%s3 + $0x68] sm:$0xff]
    %v400 = vld [vmem:[%s3 + $0x70] sm:$0xff]
    %v401 = vld [vmem:[%s3 + $0x78] sm:$0xff]
    %v402 = vld [vmem:[%s4] sm:$0x1]
    %v404 = vperm.slane %v402, 0
    %v406 = vand.u32 %v401, 4294901760
    %407 = vmatpush.msra.mxu0 %v406
    %v408 = vand.u32 %v400, 4294901760
    %409 = vmatpush.msra.mxu0 %v408
    %v410 = vand.u32 %v399, 4294901760
    %411 = vmatpush.msra.mxu0 %v410
    %v412 = vand.u32 %v398, 4294901760
    %413 = vmatpush.msra.mxu0 %v412
    %v414 = vand.u32 %v397, 4294901760
    %415 = vmatpush.msra.mxu0 %v414
    %v416 = vand.u32 %v396, 4294901760
    %417 = vmatpush.msra.mxu0 %v416
    %v418 = vand.u32 %v395, 4294901760
    %419 = vmatpush.msra.mxu0 %v418
    %v420 = vand.u32 %v394, 4294901760
    %421 = vmatpush.msra.mxu0 %v420
    %v422 = vand.u32 %v393, 4294901760
    %423 = vmatpush.msra.mxu0 %v422
    %v424 = vand.u32 %v392, 4294901760
    %425 = vmatpush.msra.mxu0 %v424
    %v426 = vand.u32 %v391, 4294901760
    %427 = vmatpush.msra.mxu0 %v426
    %v428 = vand.u32 %v390, 4294901760
    %429 = vmatpush.msra.mxu0 %v428
    %v430 = vand.u32 %v389, 4294901760
    %431 = vmatpush.msra.mxu0 %v430
    %v432 = vand.u32 %v388, 4294901760
    %433 = vmatpush.msra.mxu0 %v432
    %v434 = vand.u32 %v387, 4294901760
    %435 = vmatpush.msra.mxu0 %v434
    %v436 = vand.u32 %v386, 4294901760
    %437 = vmatpush.msra.mxu0 %v436
    %v438 = vand.u32 %v385, 4294901760
    %v439 = vsub.f32 %v385, %v438
    %v440 = vand.u32 %v439, 4294901760
    %v441 = vsub.f32 %v439, %v440
    %v442 = vand.u32 %v441, 4294901760
    %443 = vmatmul.f32.gmra.mxu0 %v442
    %v444 = vpop.f32.mrf.mxu0
    %v445 = vadd.f32 %v404, %v444
    %446 = vdwg.mxu0
    %v447 = vand.u32 %v401, 4294901760
    %v448 = vsub.f32 %v401, %v447
    %v449 = vand.u32 %v448, 4294901760
    %v450 = vsub.f32 %v448, %v449
    %v451 = vand.u32 %v450, 4294901760
    %452 = vmatpush.msra.mxu0 %v451
    %v453 = vand.u32 %v400, 4294901760
    %v454 = vsub.f32 %v400, %v453
    %v455 = vand.u32 %v454, 4294901760
    %v456 = vsub.f32 %v454, %v455
    %v457 = vand.u32 %v456, 4294901760
    %458 = vmatpush.msra.mxu0 %v457
    %v459 = vand.u32 %v399, 4294901760
    %v460 = vsub.f32 %v399, %v459
    %v461 = vand.u32 %v460, 4294901760
    %v462 = vsub.f32 %v460, %v461
    %v463 = vand.u32 %v462, 4294901760
    %464 = vmatpush.msra.mxu0 %v463
    %v465 = vand.u32 %v398, 4294901760
    %v466 = vsub.f32 %v398, %v465
    %v467 = vand.u32 %v466, 4294901760
    %v468 = vsub.f32 %v466, %v467
    %v469 = vand.u32 %v468, 4294901760
    %470 = vmatpush.msra.mxu0 %v469
    %v471 = vand.u32 %v397, 4294901760
    %v472 = vsub.f32 %v397, %v471
    %v473 = vand.u32 %v472, 4294901760
    %v474 = vsub.f32 %v472, %v473
    %v475 = vand.u32 %v474, 4294901760
    %476 = vmatpush.msra.mxu0 %v475
    %v477 = vand.u32 %v396, 4294901760
    %v478 = vsub.f32 %v396, %v477
    %v479 = vand.u32 %v478, 4294901760
    %v480 = vsub.f32 %v478, %v479
    %v481 = vand.u32 %v480, 4294901760
    %482 = vmatpush.msra.mxu0 %v481
    %v483 = vand.u32 %v395, 4294901760
    %v484 = vsub.f32 %v395, %v483
    %v485 = vand.u32 %v484, 4294901760
    %v486 = vsub.f32 %v484, %v485
    %v487 = vand.u32 %v486, 4294901760
    %488 = vmatpush.msra.mxu0 %v487
    %v489 = vand.u32 %v394, 4294901760
    %v490 = vsub.f32 %v394, %v489
    %v491 = vand.u32 %v490, 4294901760
    %v492 = vsub.f32 %v490, %v491
    %v493 = vand.u32 %v492, 4294901760
    %494 = vmatpush.msra.mxu0 %v493
    %v495 = vand.u32 %v393, 4294901760
    %v496 = vsub.f32 %v393, %v495
    %v497 = vand.u32 %v496, 4294901760
    %v498 = vsub.f32 %v496, %v497
    %v499 = vand.u32 %v498, 4294901760
    %500 = vmatpush.msra.mxu0 %v499
    %v501 = vand.u32 %v392, 4294901760
    %v502 = vsub.f32 %v392, %v501
    %v503 = vand.u32 %v502, 4294901760
    %v504 = vsub.f32 %v502, %v503
    %v505 = vand.u32 %v504, 4294901760
    %506 = vmatpush.msra.mxu0 %v505
    %v507 = vand.u32 %v391, 4294901760
    %v508 = vsub.f32 %v391, %v507
    %v509 = vand.u32 %v508, 4294901760
    %v510 = vsub.f32 %v508, %v509
    %v511 = vand.u32 %v510, 4294901760
    %512 = vmatpush.msra.mxu0 %v511
    %v513 = vand.u32 %v390, 4294901760
    %v514 = vsub.f32 %v390, %v513
    %v515 = vand.u32 %v514, 4294901760
    %v516 = vsub.f32 %v514, %v515
    %v517 = vand.u32 %v516, 4294901760
    %518 = vmatpush.msra.mxu0 %v517
    %v519 = vand.u32 %v389, 4294901760
    %v520 = vsub.f32 %v389, %v519
    %v521 = vand.u32 %v520, 4294901760
    %v522 = vsub.f32 %v520, %v521
    %v523 = vand.u32 %v522, 4294901760
    %524 = vmatpush.msra.mxu0 %v523
    %v525 = vand.u32 %v388, 4294901760
    %v526 = vsub.f32 %v388, %v525
    %v527 = vand.u32 %v526, 4294901760
    %v528 = vsub.f32 %v526, %v527
    %v529 = vand.u32 %v528, 4294901760
    %530 = vmatpush.msra.mxu0 %v529
    %v531 = vand.u32 %v387, 4294901760
    %v532 = vsub.f32 %v387, %v531
    %v533 = vand.u32 %v532, 4294901760
    %v534 = vsub.f32 %v532, %v533
    %v535 = vand.u32 %v534, 4294901760
    %536 = vmatpush.msra.mxu0 %v535
    %v537 = vand.u32 %v386, 4294901760
    %v538 = vsub.f32 %v386, %v537
    %v539 = vand.u32 %v538, 4294901760
    %v540 = vsub.f32 %v538, %v539
    %v541 = vand.u32 %v540, 4294901760
    %542 = vmatpush.msra.mxu0 %v541
    %v543 = vand.u32 %v385, 4294901760
    %544 = vmatmul.f32.gmra.mxu0 %v543
    %v545 = vpop.f32.mrf.mxu0
    %v546 = vadd.f32 %v445, %v545
    %547 = vdwg.mxu0
    %v548 = vand.u32 %v401, 4294901760
    %v549 = vsub.f32 %v401, %v548
    %550 = vmatpush.msra.mxu0 %v549
    %v551 = vand.u32 %v400, 4294901760
    %v552 = vsub.f32 %v400, %v551
    %553 = vmatpush.msra.mxu0 %v552
    %v554 = vand.u32 %v399, 4294901760
    %v555 = vsub.f32 %v399, %v554
    %556 = vmatpush.msra.mxu0 %v555
    %v557 = vand.u32 %v398, 4294901760
    %v558 = vsub.f32 %v398, %v557
    %559 = vmatpush.msra.mxu0 %v558
    %v560 = vand.u32 %v397, 4294901760
    %v561 = vsub.f32 %v397, %v560
    %562 = vmatpush.msra.mxu0 %v561
    %v563 = vand.u32 %v396, 4294901760
    %v564 = vsub.f32 %v396, %v563
    %565 = vmatpush.msra.mxu0 %v564
    %v566 = vand.u32 %v395, 4294901760
    %v567 = vsub.f32 %v395, %v566
    %568 = vmatpush.msra.mxu0 %v567
    %v569 = vand.u32 %v394, 4294901760
    %v570 = vsub.f32 %v394, %v569
    %571 = vmatpush.msra.mxu0 %v570
    %v572 = vand.u32 %v393, 4294901760
    %v573 = vsub.f32 %v393, %v572
    %574 = vmatpush.msra.mxu0 %v573
    %v575 = vand.u32 %v392, 4294901760
    %v576 = vsub.f32 %v392, %v575
    %577 = vmatpush.msra.mxu0 %v576
    %v578 = vand.u32 %v391, 4294901760
    %v579 = vsub.f32 %v391, %v578
    %580 = vmatpush.msra.mxu0 %v579
    %v581 = vand.u32 %v390, 4294901760
    %v582 = vsub.f32 %v390, %v581
    %583 = vmatpush.msra.mxu0 %v582
    %v584 = vand.u32 %v389, 4294901760
    %v585 = vsub.f32 %v389, %v584
    %586 = vmatpush.msra.mxu0 %v585
    %v587 = vand.u32 %v388, 4294901760
    %v588 = vsub.f32 %v388, %v587
    %589 = vmatpush.msra.mxu0 %v588
    %v590 = vand.u32 %v387, 4294901760
    %v591 = vsub.f32 %v387, %v590
    %592 = vmatpush.msra.mxu0 %v591
    %v593 = vand.u32 %v386, 4294901760
    %v594 = vsub.f32 %v386, %v593
    %595 = vmatpush.msra.mxu0 %v594
    %v596 = vand.u32 %v385, 4294901760
    %v597 = vsub.f32 %v385, %v596
    %598 = vmatmul.f32.gmra.mxu0 %v597
    %v599 = vpop.f32.mrf.mxu0
    %v600 = vadd.f32 %v546, %v599
    %601 = vdwg.mxu0
    %v602 = vand.u32 %v401, 4294901760
    %603 = vmatpush.msra.mxu0 %v602
    %v604 = vand.u32 %v400, 4294901760
    %605 = vmatpush.msra.mxu0 %v604
    %v606 = vand.u32 %v399, 4294901760
    %607 = vmatpush.msra.mxu0 %v606
    %v608 = vand.u32 %v398, 4294901760
    %609 = vmatpush.msra.mxu0 %v608
    %v610 = vand.u32 %v397, 4294901760
    %611 = vmatpush.msra.mxu0 %v610
    %v612 = vand.u32 %v396, 4294901760
    %613 = vmatpush.msra.mxu0 %v612
    %v614 = vand.u32 %v395, 4294901760
    %615 = vmatpush.msra.mxu0 %v614
    %v616 = vand.u32 %v394, 4294901760
    %617 = vmatpush.msra.mxu0 %v616
    %v618 = vand.u32 %v393, 4294901760
    %619 = vmatpush.msra.mxu0 %v618
    %v620 = vand.u32 %v392, 4294901760
    %621 = vmatpush.msra.mxu0 %v620
    %v622 = vand.u32 %v391, 4294901760
    %623 = vmatpush.msra.mxu0 %v622
    %v624 = vand.u32 %v390, 4294901760
    %625 = vmatpush.msra.mxu0 %v624
    %v626 = vand.u32 %v389, 4294901760
    %627 = vmatpush.msra.mxu0 %v626
    %v628 = vand.u32 %v388, 4294901760
    %629 = vmatpush.msra.mxu0 %v628
    %v630 = vand.u32 %v387, 4294901760
    %631 = vmatpush.msra.mxu0 %v630
    %v632 = vand.u32 %v386, 4294901760
    %633 = vmatpush.msra.mxu0 %v632
    %v634 = vand.u32 %v385, 4294901760
    %v635 = vsub.f32 %v385, %v634
    %v636 = vand.u32 %v635, 4294901760
    %637 = vmatmul.f32.gmra.mxu0 %v636
    %v638 = vpop.f32.mrf.mxu0
    %v639 = vadd.f32 %v600, %v638
    %640 = vdwg.mxu0
    %v641 = vand.u32 %v401, 4294901760
    %v642 = vsub.f32 %v401, %v641
    %v643 = vand.u32 %v642, 4294901760
    %644 = vmatpush.msra.mxu0 %v643
    %v645 = vand.u32 %v400, 4294901760
    %v646 = vsub.f32 %v400, %v645
    %v647 = vand.u32 %v646, 4294901760
    %648 = vmatpush.msra.mxu0 %v647
    %v649 = vand.u32 %v399, 4294901760
    %v650 = vsub.f32 %v399, %v649
    %v651 = vand.u32 %v650, 4294901760
    %652 = vmatpush.msra.mxu0 %v651
    %v653 = vand.u32 %v398, 4294901760
    %v654 = vsub.f32 %v398, %v653
    %v655 = vand.u32 %v654, 4294901760
    %656 = vmatpush.msra.mxu0 %v655
    %v657 = vand.u32 %v397, 4294901760
    %v658 = vsub.f32 %v397, %v657
    %v659 = vand.u32 %v658, 4294901760
    %660 = vmatpush.msra.mxu0 %v659
    %v661 = vand.u32 %v396, 4294901760
    %v662 = vsub.f32 %v396, %v661
    %v663 = vand.u32 %v662, 4294901760
    %664 = vmatpush.msra.mxu0 %v663
    %v665 = vand.u32 %v395, 4294901760
    %v666 = vsub.f32 %v395, %v665
    %v667 = vand.u32 %v666, 4294901760
    %668 = vmatpush.msra.mxu0 %v667
    %v669 = vand.u32 %v394, 4294901760
    %v670 = vsub.f32 %v394, %v669
    %v671 = vand.u32 %v670, 4294901760
    %672 = vmatpush.msra.mxu0 %v671
    %v673 = vand.u32 %v393, 4294901760
    %v674 = vsub.f32 %v393, %v673
    %v675 = vand.u32 %v674, 4294901760
    %676 = vmatpush.msra.mxu0 %v675
    %v677 = vand.u32 %v392, 4294901760
    %v678 = vsub.f32 %v392, %v677
    %v679 = vand.u32 %v678, 4294901760
    %680 = vmatpush.msra.mxu0 %v679
    %v681 = vand.u32 %v391, 4294901760
    %v682 = vsub.f32 %v391, %v681
    %v683 = vand.u32 %v682, 4294901760
    %684 = vmatpush.msra.mxu0 %v683
    %v685 = vand.u32 %v390, 4294901760
    %v686 = vsub.f32 %v390, %v685
    %v687 = vand.u32 %v686, 4294901760
    %688 = vmatpush.msra.mxu0 %v687
    %v689 = vand.u32 %v389, 4294901760
    %v690 = vsub.f32 %v389, %v689
    %v691 = vand.u32 %v690, 4294901760
    %692 = vmatpush.msra.mxu0 %v691
    %v693 = vand.u32 %v388, 4294901760
    %v694 = vsub.f32 %v388, %v693
    %v695 = vand.u32 %v694, 4294901760
    %696 = vmatpush.msra.mxu0 %v695
    %v697 = vand.u32 %v387, 4294901760
    %v698 = vsub.f32 %v387, %v697
    %v699 = vand.u32 %v698, 4294901760
    %700 = vmatpush.msra.mxu0 %v699
    %v701 = vand.u32 %v386, 4294901760
    %v702 = vsub.f32 %v386, %v701
    %v703 = vand.u32 %v702, 4294901760
    %704 = vmatpush.msra.mxu0 %v703
    %v705 = vand.u32 %v385, 4294901760
    %706 = vmatmul.f32.gmra.mxu0 %v705
    %v707 = vpop.f32.mrf.mxu0
    %v708 = vadd.f32 %v639, %v707
    %709 = vdwg.mxu0
    %v710 = vand.u32 %v401, 4294901760
    %711 = vmatpush.msra.mxu0 %v710
    %v712 = vand.u32 %v400, 4294901760
    %713 = vmatpush.msra.mxu0 %v712
    %v714 = vand.u32 %v399, 4294901760
    %715 = vmatpush.msra.mxu0 %v714
    %v716 = vand.u32 %v398, 4294901760
    %717 = vmatpush.msra.mxu0 %v716
    %v718 = vand.u32 %v397, 4294901760
    %719 = vmatpush.msra.mxu0 %v718
    %v720 = vand.u32 %v396, 4294901760
    %721 = vmatpush.msra.mxu0 %v720
    %v722 = vand.u32 %v395, 4294901760
    %723 = vmatpush.msra.mxu0 %v722
    %v724 = vand.u32 %v394, 4294901760
    %725 = vmatpush.msra.mxu0 %v724
    %v726 = vand.u32 %v393, 4294901760
    %727 = vmatpush.msra.mxu0 %v726
    %v728 = vand.u32 %v392, 4294901760
    %729 = vmatpush.msra.mxu0 %v728
    %v730 = vand.u32 %v391, 4294901760
    %731 = vmatpush.msra.mxu0 %v730
    %v732 = vand.u32 %v390, 4294901760
    %733 = vmatpush.msra.mxu0 %v732
    %v734 = vand.u32 %v389, 4294901760
    %735 = vmatpush.msra.mxu0 %v734
    %v736 = vand.u32 %v388, 4294901760
    %737 = vmatpush.msra.mxu0 %v736
    %v738 = vand.u32 %v387, 4294901760
    %739 = vmatpush.msra.mxu0 %v738
    %v740 = vand.u32 %v386, 4294901760
    %741 = vmatpush.msra.mxu0 %v740
    %v742 = vand.u32 %v385, 4294901760
    %743 = vmatmul.f32.gmra.mxu0 %v742
    %v744 = vpop.f32.mrf.mxu0
    %v745 = vadd.f32 %v708, %v744
    %746 = vdwg.mxu0
    %v747 = vmax.f32 %v745, 0.0
    %v748 = vld [vmem:[#allocation6] sm:$0xff]
    %v749 = vld [vmem:[#allocation6 + $0x8] sm:$0xff]
    %v750 = vld [vmem:[#allocation6 + $0x10] sm:$0xff]
    %v751 = vld [vmem:[#allocation6 + $0x18] sm:$0xff]
    %v752 = vld [vmem:[#allocation6 + $0x20] sm:$0xff]
    %v753 = vld [vmem:[#allocation6 + $0x28] sm:$0xff]
    %v754 = vld [vmem:[#allocation6 + $0x30] sm:$0xff]
    %v755 = vld [vmem:[#allocation6 + $0x38] sm:$0xff]
    %v756 = vld [vmem:[#allocation6 + $0x40] sm:$0xff]
    %v757 = vld [vmem:[#allocation6 + $0x48] sm:$0xff]
    %v758 = vld [vmem:[#allocation6 + $0x50] sm:$0xff]
    %v759 = vld [vmem:[#allocation6 + $0x58] sm:$0xff]
    %v760 = vld [vmem:[#allocation6 + $0x60] sm:$0xff]
    %v761 = vld [vmem:[#allocation6 + $0x68] sm:$0xff]
    %v762 = vld [vmem:[#allocation6 + $0x70] sm:$0xff]
    %v763 = vld [vmem:[#allocation6 + $0x78] sm:$0xff]
    %v764 = vld [vmem:[%s6] sm:$0x1]
    %v766 = vperm.slane %v764, 0
    %v768 = vand.u32 %v763, 4294901760
    %769 = vmatpush.msra.mxu0 %v768
    %v770 = vand.u32 %v762, 4294901760
    %771 = vmatpush.msra.mxu0 %v770
    %v772 = vand.u32 %v761, 4294901760
    %773 = vmatpush.msra.mxu0 %v772
    %v774 = vand.u32 %v760, 4294901760
    %775 = vmatpush.msra.mxu0 %v774
    %v776 = vand.u32 %v759, 4294901760
    %777 = vmatpush.msra.mxu0 %v776
    %v778 = vand.u32 %v758, 4294901760
    %779 = vmatpush.msra.mxu0 %v778
    %v780 = vand.u32 %v757, 4294901760
    %781 = vmatpush.msra.mxu0 %v780
    %v782 = vand.u32 %v756, 4294901760
    %783 = vmatpush.msra.mxu0 %v782
    %v784 = vand.u32 %v755, 4294901760
    %785 = vmatpush.msra.mxu0 %v784
    %v786 = vand.u32 %v754, 4294901760
    %787 = vmatpush.msra.mxu0 %v786
    %v788 = vand.u32 %v753, 4294901760
    %789 = vmatpush.msra.mxu0 %v788
    %v790 = vand.u32 %v752, 4294901760
    %791 = vmatpush.msra.mxu0 %v790
    %v792 = vand.u32 %v751, 4294901760
    %793 = vmatpush.msra.mxu0 %v792
    %v794 = vand.u32 %v750, 4294901760
    %795 = vmatpush.msra.mxu0 %v794
    %v796 = vand.u32 %v749, 4294901760
    %797 = vmatpush.msra.mxu0 %v796
    %v798 = vand.u32 %v748, 4294901760
    %799 = vmatpush.msra.mxu0 %v798
    %v800 = vand.u32 %v747, 4294901760
    %v801 = vsub.f32 %v747, %v800
    %v802 = vand.u32 %v801, 4294901760
    %v803 = vsub.f32 %v801, %v802
    %v804 = vand.u32 %v803, 4294901760
    %805 = vmatmul.f32.gmra.mxu0 %v804
    %v806 = vpop.f32.mrf.mxu0
    %v807 = vadd.f32 %v766, %v806
    %808 = vdwg.mxu0
    %v809 = vand.u32 %v763, 4294901760
    %v810 = vsub.f32 %v763, %v809
    %v811 = vand.u32 %v810, 4294901760
    %v812 = vsub.f32 %v810, %v811
    %v813 = vand.u32 %v812, 4294901760
    %814 = vmatpush.msra.mxu0 %v813
    %v815 = vand.u32 %v762, 4294901760
    %v816 = vsub.f32 %v762, %v815
    %v817 = vand.u32 %v816, 4294901760
    %v818 = vsub.f32 %v816, %v817
    %v819 = vand.u32 %v818, 4294901760
    %820 = vmatpush.msra.mxu0 %v819
    %v821 = vand.u32 %v761, 4294901760
    %v822 = vsub.f32 %v761, %v821
    %v823 = vand.u32 %v822, 4294901760
    %v824 = vsub.f32 %v822, %v823
    %v825 = vand.u32 %v824, 4294901760
    %826 = vmatpush.msra.mxu0 %v825
    %v827 = vand.u32 %v760, 4294901760
    %v828 = vsub.f32 %v760, %v827
    %v829 = vand.u32 %v828, 4294901760
    %v830 = vsub.f32 %v828, %v829
    %v831 = vand.u32 %v830, 4294901760
    %832 = vmatpush.msra.mxu0 %v831
    %v833 = vand.u32 %v759, 4294901760
    %v834 = vsub.f32 %v759, %v833
    %v835 = vand.u32 %v834, 4294901760
    %v836 = vsub.f32 %v834, %v835
    %v837 = vand.u32 %v836, 4294901760
    %838 = vmatpush.msra.mxu0 %v837
    %v839 = vand.u32 %v758, 4294901760
    %v840 = vsub.f32 %v758, %v839
    %v841 = vand.u32 %v840, 4294901760
    %v842 = vsub.f32 %v840, %v841
    %v843 = vand.u32 %v842, 4294901760
    %844 = vmatpush.msra.mxu0 %v843
    %v845 = vand.u32 %v757, 4294901760
    %v846 = vsub.f32 %v757, %v845
    %v847 = vand.u32 %v846, 4294901760
    %v848 = vsub.f32 %v846, %v847
    %v849 = vand.u32 %v848, 4294901760
    %850 = vmatpush.msra.mxu0 %v849
    %v851 = vand.u32 %v756, 4294901760
    %v852 = vsub.f32 %v756, %v851
    %v853 = vand.u32 %v852, 4294901760
    %v854 = vsub.f32 %v852, %v853
    %v855 = vand.u32 %v854, 4294901760
    %856 = vmatpush.msra.mxu0 %v855
    %v857 = vand.u32 %v755, 4294901760
    %v858 = vsub.f32 %v755, %v857
    %v859 = vand.u32 %v858, 4294901760
    %v860 = vsub.f32 %v858, %v859
    %v861 = vand.u32 %v860, 4294901760
    %862 = vmatpush.msra.mxu0 %v861
    %v863 = vand.u32 %v754, 4294901760
    %v864 = vsub.f32 %v754, %v863
    %v865 = vand.u32 %v864, 4294901760
    %v866 = vsub.f32 %v864, %v865
    %v867 = vand.u32 %v866, 4294901760
    %868 = vmatpush.msra.mxu0 %v867
    %v869 = vand.u32 %v753, 4294901760
    %v870 = vsub.f32 %v753, %v869
    %v871 = vand.u32 %v870, 4294901760
    %v872 = vsub.f32 %v870, %v871
    %v873 = vand.u32 %v872, 4294901760
    %874 = vmatpush.msra.mxu0 %v873
    %v875 = vand.u32 %v752, 4294901760
    %v876 = vsub.f32 %v752, %v875
    %v877 = vand.u32 %v876, 4294901760
    %v878 = vsub.f32 %v876, %v877
    %v879 = vand.u32 %v878, 4294901760
    %880 = vmatpush.msra.mxu0 %v879
    %v881 = vand.u32 %v751, 4294901760
    %v882 = vsub.f32 %v751, %v881
    %v883 = vand.u32 %v882, 4294901760
    %v884 = vsub.f32 %v882, %v883
    %v885 = vand.u32 %v884, 4294901760
    %886 = vmatpush.msra.mxu0 %v885
    %v887 = vand.u32 %v750, 4294901760
    %v888 = vsub.f32 %v750, %v887
    %v889 = vand.u32 %v888, 4294901760
    %v890 = vsub.f32 %v888, %v889
    %v891 = vand.u32 %v890, 4294901760
    %892 = vmatpush.msra.mxu0 %v891
    %v893 = vand.u32 %v749, 4294901760
    %v894 = vsub.f32 %v749, %v893
    %v895 = vand.u32 %v894, 4294901760
    %v896 = vsub.f32 %v894, %v895
    %v897 = vand.u32 %v896, 4294901760
    %898 = vmatpush.msra.mxu0 %v897
    %v899 = vand.u32 %v748, 4294901760
    %v900 = vsub.f32 %v748, %v899
    %v901 = vand.u32 %v900, 4294901760
    %v902 = vsub.f32 %v900, %v901
    %v903 = vand.u32 %v902, 4294901760
    %904 = vmatpush.msra.mxu0 %v903
    %v905 = vand.u32 %v747, 4294901760
    %906 = vmatmul.f32.gmra.mxu0 %v905
    %v907 = vpop.f32.mrf.mxu0
    %v908 = vadd.f32 %v807, %v907
    %909 = vdwg.mxu0
    %v910 = vand.u32 %v763, 4294901760
    %v911 = vsub.f32 %v763, %v910
    %912 = vmatpush.msra.mxu0 %v911
    %v913 = vand.u32 %v762, 4294901760
    %v914 = vsub.f32 %v762, %v913
    %915 = vmatpush.msra.mxu0 %v914
    %v916 = vand.u32 %v761, 4294901760
    %v917 = vsub.f32 %v761, %v916
    %918 = vmatpush.msra.mxu0 %v917
    %v919 = vand.u32 %v760, 4294901760
    %v920 = vsub.f32 %v760, %v919
    %921 = vmatpush.msra.mxu0 %v920
    %v922 = vand.u32 %v759, 4294901760
    %v923 = vsub.f32 %v759, %v922
    %924 = vmatpush.msra.mxu0 %v923
    %v925 = vand.u32 %v758, 4294901760
    %v926 = vsub.f32 %v758, %v925
    %927 = vmatpush.msra.mxu0 %v926
    %v928 = vand.u32 %v757, 4294901760
    %v929 = vsub.f32 %v757, %v928
    %930 = vmatpush.msra.mxu0 %v929
    %v931 = vand.u32 %v756, 4294901760
    %v932 = vsub.f32 %v756, %v931
    %933 = vmatpush.msra.mxu0 %v932
    %v934 = vand.u32 %v755, 4294901760
    %v935 = vsub.f32 %v755, %v934
    %936 = vmatpush.msra.mxu0 %v935
    %v937 = vand.u32 %v754, 4294901760
    %v938 = vsub.f32 %v754, %v937
    %939 = vmatpush.msra.mxu0 %v938
    %v940 = vand.u32 %v753, 4294901760
    %v941 = vsub.f32 %v753, %v940
    %942 = vmatpush.msra.mxu0 %v941
    %v943 = vand.u32 %v752, 4294901760
    %v944 = vsub.f32 %v752, %v943
    %945 = vmatpush.msra.mxu0 %v944
    %v946 = vand.u32 %v751, 4294901760
    %v947 = vsub.f32 %v751, %v946
    %948 = vmatpush.msra.mxu0 %v947
    %v949 = vand.u32 %v750, 4294901760
    %v950 = vsub.f32 %v750, %v949
    %951 = vmatpush.msra.mxu0 %v950
    %v952 = vand.u32 %v749, 4294901760
    %v953 = vsub.f32 %v749, %v952
    %954 = vmatpush.msra.mxu0 %v953
    %v955 = vand.u32 %v748, 4294901760
    %v956 = vsub.f32 %v748, %v955
    %957 = vmatpush.msra.mxu0 %v956
    %v958 = vand.u32 %v747, 4294901760
    %v959 = vsub.f32 %v747, %v958
    %960 = vmatmul.f32.gmra.mxu0 %v959
    %v961 = vpop.f32.mrf.mxu0
    %v962 = vadd.f32 %v908, %v961
    %963 = vdwg.mxu0
    %v964 = vand.u32 %v763, 4294901760
    %965 = vmatpush.msra.mxu0 %v964
    %v966 = vand.u32 %v762, 4294901760
    %967 = vmatpush.msra.mxu0 %v966
    %v968 = vand.u32 %v761, 4294901760
    %969 = vmatpush.msra.mxu0 %v968
    %v970 = vand.u32 %v760, 4294901760
    %971 = vmatpush.msra.mxu0 %v970
    %v972 = vand.u32 %v759, 4294901760
    %973 = vmatpush.msra.mxu0 %v972
    %v974 = vand.u32 %v758, 4294901760
    %975 = vmatpush.msra.mxu0 %v974
    %v976 = vand.u32 %v757, 4294901760
    %977 = vmatpush.msra.mxu0 %v976
    %v978 = vand.u32 %v756, 4294901760
    %979 = vmatpush.msra.mxu0 %v978
    %v980 = vand.u32 %v755, 4294901760
    %981 = vmatpush.msra.mxu0 %v980
    %v982 = vand.u32 %v754, 4294901760
    %983 = vmatpush.msra.mxu0 %v982
    %v984 = vand.u32 %v753, 4294901760
    %985 = vmatpush.msra.mxu0 %v984
    %v986 = vand.u32 %v752, 4294901760
    %987 = vmatpush.msra.mxu0 %v986
    %v988 = vand.u32 %v751, 4294901760
    %989 = vmatpush.msra.mxu0 %v988
    %v990 = vand.u32 %v750, 4294901760
    %991 = vmatpush.msra.mxu0 %v990
    %v992 = vand.u32 %v749, 4294901760
    %993 = vmatpush.msra.mxu0 %v992
    %v994 = vand.u32 %v748, 4294901760
    %995 = vmatpush.msra.mxu0 %v994
    %v996 = vand.u32 %v747, 4294901760
    %v997 = vsub.f32 %v747, %v996
    %v998 = vand.u32 %v997, 4294901760
    %999 = vmatmul.f32.gmra.mxu0 %v998
    %v1000 = vpop.f32.mrf.mxu0
    %v1001 = vadd.f32 %v962, %v1000
    %1002 = vdwg.mxu0
    %v1003 = vand.u32 %v763, 4294901760
    %v1004 = vsub.f32 %v763, %v1003
    %v1005 = vand.u32 %v1004, 4294901760
    %1006 = vmatpush.msra.mxu0 %v1005
    %v1007 = vand.u32 %v762, 4294901760
    %v1008 = vsub.f32 %v762, %v1007
    %v1009 = vand.u32 %v1008, 4294901760
    %1010 = vmatpush.msra.mxu0 %v1009
    %v1011 = vand.u32 %v761, 4294901760
    %v1012 = vsub.f32 %v761, %v1011
    %v1013 = vand.u32 %v1012, 4294901760
    %1014 = vmatpush.msra.mxu0 %v1013
    %v1015 = vand.u32 %v760, 4294901760
    %v1016 = vsub.f32 %v760, %v1015
    %v1017 = vand.u32 %v1016, 4294901760
    %1018 = vmatpush.msra.mxu0 %v1017
    %v1019 = vand.u32 %v759, 4294901760
    %v1020 = vsub.f32 %v759, %v1019
    %v1021 = vand.u32 %v1020, 4294901760
    %1022 = vmatpush.msra.mxu0 %v1021
    %v1023 = vand.u32 %v758, 4294901760
    %v1024 = vsub.f32 %v758, %v1023
    %v1025 = vand.u32 %v1024, 4294901760
    %1026 = vmatpush.msra.mxu0 %v1025
    %v1027 = vand.u32 %v757, 4294901760
    %v1028 = vsub.f32 %v757, %v1027
    %v1029 = vand.u32 %v1028, 4294901760
    %1030 = vmatpush.msra.mxu0 %v1029
    %v1031 = vand.u32 %v756, 4294901760
    %v1032 = vsub.f32 %v756, %v1031
    %v1033 = vand.u32 %v1032, 4294901760
    %1034 = vmatpush.msra.mxu0 %v1033
    %v1035 = vand.u32 %v755, 4294901760
    %v1036 = vsub.f32 %v755, %v1035
    %v1037 = vand.u32 %v1036, 4294901760
    %1038 = vmatpush.msra.mxu0 %v1037
    %v1039 = vand.u32 %v754, 4294901760
    %v1040 = vsub.f32 %v754, %v1039
    %v1041 = vand.u32 %v1040, 4294901760
    %1042 = vmatpush.msra.mxu0 %v1041
    %v1043 = vand.u32 %v753, 4294901760
    %v1044 = vsub.f32 %v753, %v1043
    %v1045 = vand.u32 %v1044, 4294901760
    %1046 = vmatpush.msra.mxu0 %v1045
    %v1047 = vand.u32 %v752, 4294901760
    %v1048 = vsub.f32 %v752, %v1047
    %v1049 = vand.u32 %v1048, 4294901760
    %1050 = vmatpush.msra.mxu0 %v1049
    %v1051 = vand.u32 %v751, 4294901760
    %v1052 = vsub.f32 %v751, %v1051
    %v1053 = vand.u32 %v1052, 4294901760
    %1054 = vmatpush.msra.mxu0 %v1053
    %v1055 = vand.u32 %v750, 4294901760
    %v1056 = vsub.f32 %v750, %v1055
    %v1057 = vand.u32 %v1056, 4294901760
    %1058 = vmatpush.msra.mxu0 %v1057
    %v1059 = vand.u32 %v749, 4294901760
    %v1060 = vsub.f32 %v749, %v1059
    %v1061 = vand.u32 %v1060, 4294901760
    %1062 = vmatpush.msra.mxu0 %v1061
    %v1063 = vand.u32 %v748, 4294901760
    %v1064 = vsub.f32 %v748, %v1063
    %v1065 = vand.u32 %v1064, 4294901760
    %1066 = vmatpush.msra.mxu0 %v1065
    %v1067 = vand.u32 %v747, 4294901760
    %1068 = vmatmul.f32.gmra.mxu0 %v1067
    %v1069 = vpop.f32.mrf.mxu0
    %v1070 = vadd.f32 %v1001, %v1069
    %1071 = vdwg.mxu0
    %v1072 = vand.u32 %v763, 4294901760
    %1073 = vmatpush.msra.mxu0 %v1072
    %v1074 = vand.u32 %v762, 4294901760
    %1075 = vmatpush.msra.mxu0 %v1074
    %v1076 = vand.u32 %v761, 4294901760
    %1077 = vmatpush.msra.mxu0 %v1076
    %v1078 = vand.u32 %v760, 4294901760
    %1079 = vmatpush.msra.mxu0 %v1078
    %v1080 = vand.u32 %v759, 4294901760
    %1081 = vmatpush.msra.mxu0 %v1080
    %v1082 = vand.u32 %v758, 4294901760
    %1083 = vmatpush.msra.mxu0 %v1082
    %v1084 = vand.u32 %v757, 4294901760
    %1085 = vmatpush.msra.mxu0 %v1084
    %v1086 = vand.u32 %v756, 4294901760
    %1087 = vmatpush.msra.mxu0 %v1086
    %v1088 = vand.u32 %v755, 4294901760
    %1089 = vmatpush.msra.mxu0 %v1088
    %v1090 = vand.u32 %v754, 4294901760
    %1091 = vmatpush.msra.mxu0 %v1090
    %v1092 = vand.u32 %v753, 4294901760
    %1093 = vmatpush.msra.mxu0 %v1092
    %v1094 = vand.u32 %v752, 4294901760
    %1095 = vmatpush.msra.mxu0 %v1094
    %v1096 = vand.u32 %v751, 4294901760
    %1097 = vmatpush.msra.mxu0 %v1096
    %v1098 = vand.u32 %v750, 4294901760
    %1099 = vmatpush.msra.mxu0 %v1098
    %v1100 = vand.u32 %v749, 4294901760
    %1101 = vmatpush.msra.mxu0 %v1100
    %v1102 = vand.u32 %v748, 4294901760
    %1103 = vmatpush.msra.mxu0 %v1102
    %v1104 = vand.u32 %v747, 4294901760
    %1105 = vmatmul.f32.gmra.mxu0 %v1104
    %v1106 = vpop.f32.mrf.mxu0
    %v1107 = vadd.f32 %v1070, %v1106
    %1108 = vdwg.mxu0
    %v1109 = vmax.f32 %v1107, 0.0
    %v1110 = vld [vmem:[#allocation7] sm:$0xff]
    %v1111 = vld [vmem:[#allocation7 + $0x8] sm:$0xff]
    %v1112 = vld [vmem:[#allocation7 + $0x10] sm:$0xff]
    %v1113 = vld [vmem:[#allocation7 + $0x18] sm:$0xff]
    %v1114 = vld [vmem:[#allocation7 + $0x20] sm:$0xff]
    %v1115 = vld [vmem:[#allocation7 + $0x28] sm:$0xff]
    %v1116 = vld [vmem:[#allocation7 + $0x30] sm:$0xff]
    %v1117 = vld [vmem:[#allocation7 + $0x38] sm:$0xff]
    %v1118 = vld [vmem:[#allocation7 + $0x40] sm:$0xff]
    %v1119 = vld [vmem:[#allocation7 + $0x48] sm:$0xff]
    %v1120 = vld [vmem:[#allocation7 + $0x50] sm:$0xff]
    %v1121 = vld [vmem:[#allocation7 + $0x58] sm:$0xff]
    %v1122 = vld [vmem:[#allocation7 + $0x60] sm:$0xff]
    %v1123 = vld [vmem:[#allocation7 + $0x68] sm:$0xff]
    %v1124 = vld [vmem:[#allocation7 + $0x70] sm:$0xff]
    %v1125 = vld [vmem:[#allocation7 + $0x78] sm:$0xff]
    %v1126 = vld [vmem:[%s8] sm:$0x1]
    %v1128 = vperm.slane %v1126, 0
    %v1130 = vand.u32 %v1125, 4294901760
    %1131 = vmatpush.msra.mxu0 %v1130
    %v1132 = vand.u32 %v1124, 4294901760
    %1133 = vmatpush.msra.mxu0 %v1132
    %v1134 = vand.u32 %v1123, 4294901760
    %1135 = vmatpush.msra.mxu0 %v1134
    %v1136 = vand.u32 %v1122, 4294901760
    %1137 = vmatpush.msra.mxu0 %v1136
    %v1138 = vand.u32 %v1121, 4294901760
    %1139 = vmatpush.msra.mxu0 %v1138
    %v1140 = vand.u32 %v1120, 4294901760
    %1141 = vmatpush.msra.mxu0 %v1140
    %v1142 = vand.u32 %v1119, 4294901760
    %1143 = vmatpush.msra.mxu0 %v1142
    %v1144 = vand.u32 %v1118, 4294901760
    %1145 = vmatpush.msra.mxu0 %v1144
    %v1146 = vand.u32 %v1117, 4294901760
    %1147 = vmatpush.msra.mxu0 %v1146
    %v1148 = vand.u32 %v1116, 4294901760
    %1149 = vmatpush.msra.mxu0 %v1148
    %v1150 = vand.u32 %v1115, 4294901760
    %1151 = vmatpush.msra.mxu0 %v1150
    %v1152 = vand.u32 %v1114, 4294901760
    %1153 = vmatpush.msra.mxu0 %v1152
    %v1154 = vand.u32 %v1113, 4294901760
    %1155 = vmatpush.msra.mxu0 %v1154
    %v1156 = vand.u32 %v1112, 4294901760
    %1157 = vmatpush.msra.mxu0 %v1156
    %v1158 = vand.u32 %v1111, 4294901760
    %1159 = vmatpush.msra.mxu0 %v1158
    %v1160 = vand.u32 %v1110, 4294901760
    %1161 = vmatpush.msra.mxu0 %v1160
    %v1162 = vand.u32 %v1109, 4294901760
    %v1163 = vsub.f32 %v1109, %v1162
    %v1164 = vand.u32 %v1163, 4294901760
    %v1165 = vsub.f32 %v1163, %v1164
    %v1166 = vand.u32 %v1165, 4294901760
    %1167 = vmatmul.f32.gmra.mxu0 %v1166
    %v1168 = vpop.f32.mrf.mxu0
    %v1169 = vadd.f32 %v1128, %v1168
    %1170 = vdwg.mxu0
    %v1171 = vand.u32 %v1125, 4294901760
    %v1172 = vsub.f32 %v1125, %v1171
    %v1173 = vand.u32 %v1172, 4294901760
    %v1174 = vsub.f32 %v1172, %v1173
    %v1175 = vand.u32 %v1174, 4294901760
    %1176 = vmatpush.msra.mxu0 %v1175
    %v1177 = vand.u32 %v1124, 4294901760
    %v1178 = vsub.f32 %v1124, %v1177
    %v1179 = vand.u32 %v1178, 4294901760
    %v1180 = vsub.f32 %v1178, %v1179
    %v1181 = vand.u32 %v1180, 4294901760
    %1182 = vmatpush.msra.mxu0 %v1181
    %v1183 = vand.u32 %v1123, 4294901760
    %v1184 = vsub.f32 %v1123, %v1183
    %v1185 = vand.u32 %v1184, 4294901760
    %v1186 = vsub.f32 %v1184, %v1185
    %v1187 = vand.u32 %v1186, 4294901760
    %1188 = vmatpush.msra.mxu0 %v1187
    %v1189 = vand.u32 %v1122, 4294901760
    %v1190 = vsub.f32 %v1122, %v1189
    %v1191 = vand.u32 %v1190, 4294901760
    %v1192 = vsub.f32 %v1190, %v1191
    %v1193 = vand.u32 %v1192, 4294901760
    %1194 = vmatpush.msra.mxu0 %v1193
    %v1195 = vand.u32 %v1121, 4294901760
    %v1196 = vsub.f32 %v1121, %v1195
    %v1197 = vand.u32 %v1196, 4294901760
    %v1198 = vsub.f32 %v1196, %v1197
    %v1199 = vand.u32 %v1198, 4294901760
    %1200 = vmatpush.msra.mxu0 %v1199
    %v1201 = vand.u32 %v1120, 4294901760
    %v1202 = vsub.f32 %v1120, %v1201
    %v1203 = vand.u32 %v1202, 4294901760
    %v1204 = vsub.f32 %v1202, %v1203
    %v1205 = vand.u32 %v1204, 4294901760
    %1206 = vmatpush.msra.mxu0 %v1205
    %v1207 = vand.u32 %v1119, 4294901760
    %v1208 = vsub.f32 %v1119, %v1207
    %v1209 = vand.u32 %v1208, 4294901760
    %v1210 = vsub.f32 %v1208, %v1209
    %v1211 = vand.u32 %v1210, 4294901760
    %1212 = vmatpush.msra.mxu0 %v1211
    %v1213 = vand.u32 %v1118, 4294901760
    %v1214 = vsub.f32 %v1118, %v1213
    %v1215 = vand.u32 %v1214, 4294901760
    %v1216 = vsub.f32 %v1214, %v1215
    %v1217 = vand.u32 %v1216, 4294901760
    %1218 = vmatpush.msra.mxu0 %v1217
    %v1219 = vand.u32 %v1117, 4294901760
    %v1220 = vsub.f32 %v1117, %v1219
    %v1221 = vand.u32 %v1220, 4294901760
    %v1222 = vsub.f32 %v1220, %v1221
    %v1223 = vand.u32 %v1222, 4294901760
    %1224 = vmatpush.msra.mxu0 %v1223
    %v1225 = vand.u32 %v1116, 4294901760
    %v1226 = vsub.f32 %v1116, %v1225
    %v1227 = vand.u32 %v1226, 4294901760
    %v1228 = vsub.f32 %v1226, %v1227
    %v1229 = vand.u32 %v1228, 4294901760
    %1230 = vmatpush.msra.mxu0 %v1229
    %v1231 = vand.u32 %v1115, 4294901760
    %v1232 = vsub.f32 %v1115, %v1231
    %v1233 = vand.u32 %v1232, 4294901760
    %v1234 = vsub.f32 %v1232, %v1233
    %v1235 = vand.u32 %v1234, 4294901760
    %1236 = vmatpush.msra.mxu0 %v1235
    %v1237 = vand.u32 %v1114, 4294901760
    %v1238 = vsub.f32 %v1114, %v1237
    %v1239 = vand.u32 %v1238, 4294901760
    %v1240 = vsub.f32 %v1238, %v1239
    %v1241 = vand.u32 %v1240, 4294901760
    %1242 = vmatpush.msra.mxu0 %v1241
    %v1243 = vand.u32 %v1113, 4294901760
    %v1244 = vsub.f32 %v1113, %v1243
    %v1245 = vand.u32 %v1244, 4294901760
    %v1246 = vsub.f32 %v1244, %v1245
    %v1247 = vand.u32 %v1246, 4294901760
    %1248 = vmatpush.msra.mxu0 %v1247
    %v1249 = vand.u32 %v1112, 4294901760
    %v1250 = vsub.f32 %v1112, %v1249
    %v1251 = vand.u32 %v1250, 4294901760
    %v1252 = vsub.f32 %v1250, %v1251
    %v1253 = vand.u32 %v1252, 4294901760
    %1254 = vmatpush.msra.mxu0 %v1253
    %v1255 = vand.u32 %v1111, 4294901760
    %v1256 = vsub.f32 %v1111, %v1255
    %v1257 = vand.u32 %v1256, 4294901760
    %v1258 = vsub.f32 %v1256, %v1257
    %v1259 = vand.u32 %v1258, 4294901760
    %1260 = vmatpush.msra.mxu0 %v1259
    %v1261 = vand.u32 %v1110, 4294901760
    %v1262 = vsub.f32 %v1110, %v1261
    %v1263 = vand.u32 %v1262, 4294901760
    %v1264 = vsub.f32 %v1262, %v1263
    %v1265 = vand.u32 %v1264, 4294901760
    %1266 = vmatpush.msra.mxu0 %v1265
    %v1267 = vand.u32 %v1109, 4294901760
    %1268 = vmatmul.f32.gmra.mxu0 %v1267
    %v1269 = vpop.f32.mrf.mxu0
    %v1270 = vadd.f32 %v1169, %v1269
    %1271 = vdwg.mxu0
    %v1272 = vand.u32 %v1125, 4294901760
    %v1273 = vsub.f32 %v1125, %v1272
    %1274 = vmatpush.msra.mxu0 %v1273
    %v1275 = vand.u32 %v1124, 4294901760
    %v1276 = vsub.f32 %v1124, %v1275
    %1277 = vmatpush.msra.mxu0 %v1276
    %v1278 = vand.u32 %v1123, 4294901760
    %v1279 = vsub.f32 %v1123, %v1278
    %1280 = vmatpush.msra.mxu0 %v1279
    %v1281 = vand.u32 %v1122, 4294901760
    %v1282 = vsub.f32 %v1122, %v1281
    %1283 = vmatpush.msra.mxu0 %v1282
    %v1284 = vand.u32 %v1121, 4294901760
    %v1285 = vsub.f32 %v1121, %v1284
    %1286 = vmatpush.msra.mxu0 %v1285
    %v1287 = vand.u32 %v1120, 4294901760
    %v1288 = vsub.f32 %v1120, %v1287
    %1289 = vmatpush.msra.mxu0 %v1288
    %v1290 = vand.u32 %v1119, 4294901760
    %v1291 = vsub.f32 %v1119, %v1290
    %1292 = vmatpush.msra.mxu0 %v1291
    %v1293 = vand.u32 %v1118, 4294901760
    %v1294 = vsub.f32 %v1118, %v1293
    %1295 = vmatpush.msra.mxu0 %v1294
    %v1296 = vand.u32 %v1117, 4294901760
    %v1297 = vsub.f32 %v1117, %v1296
    %1298 = vmatpush.msra.mxu0 %v1297
    %v1299 = vand.u32 %v1116, 4294901760
    %v1300 = vsub.f32 %v1116, %v1299
    %1301 = vmatpush.msra.mxu0 %v1300
    %v1302 = vand.u32 %v1115, 4294901760
    %v1303 = vsub.f32 %v1115, %v1302
    %1304 = vmatpush.msra.mxu0 %v1303
    %v1305 = vand.u32 %v1114, 4294901760
    %v1306 = vsub.f32 %v1114, %v1305
    %1307 = vmatpush.msra.mxu0 %v1306
    %v1308 = vand.u32 %v1113, 4294901760
    %v1309 = vsub.f32 %v1113, %v1308
    %1310 = vmatpush.msra.mxu0 %v1309
    %v1311 = vand.u32 %v1112, 4294901760
    %v1312 = vsub.f32 %v1112, %v1311
    %1313 = vmatpush.msra.mxu0 %v1312
    %v1314 = vand.u32 %v1111, 4294901760
    %v1315 = vsub.f32 %v1111, %v1314
    %1316 = vmatpush.msra.mxu0 %v1315
    %v1317 = vand.u32 %v1110, 4294901760
    %v1318 = vsub.f32 %v1110, %v1317
    %1319 = vmatpush.msra.mxu0 %v1318
    %v1320 = vand.u32 %v1109, 4294901760
    %v1321 = vsub.f32 %v1109, %v1320
    %1322 = vmatmul.f32.gmra.mxu0 %v1321
    %v1323 = vpop.f32.mrf.mxu0
    %v1324 = vadd.f32 %v1270, %v1323
    %1325 = vdwg.mxu0
    %v1326 = vand.u32 %v1125, 4294901760
    %1327 = vmatpush.msra.mxu0 %v1326
    %v1328 = vand.u32 %v1124, 4294901760
    %1329 = vmatpush.msra.mxu0 %v1328
    %v1330 = vand.u32 %v1123, 4294901760
    %1331 = vmatpush.msra.mxu0 %v1330
    %v1332 = vand.u32 %v1122, 4294901760
    %1333 = vmatpush.msra.mxu0 %v1332
    %v1334 = vand.u32 %v1121, 4294901760
    %1335 = vmatpush.msra.mxu0 %v1334
    %v1336 = vand.u32 %v1120, 4294901760
    %1337 = vmatpush.msra.mxu0 %v1336
    %v1338 = vand.u32 %v1119, 4294901760
    %1339 = vmatpush.msra.mxu0 %v1338
    %v1340 = vand.u32 %v1118, 4294901760
    %1341 = vmatpush.msra.mxu0 %v1340
    %v1342 = vand.u32 %v1117, 4294901760
    %1343 = vmatpush.msra.mxu0 %v1342
    %v1344 = vand.u32 %v1116, 4294901760
    %1345 = vmatpush.msra.mxu0 %v1344
    %v1346 = vand.u32 %v1115, 4294901760
    %1347 = vmatpush.msra.mxu0 %v1346
    %v1348 = vand.u32 %v1114, 4294901760
    %1349 = vmatpush.msra.mxu0 %v1348
    %v1350 = vand.u32 %v1113, 4294901760
    %1351 = vmatpush.msra.mxu0 %v1350
    %v1352 = vand.u32 %v1112, 4294901760
    %1353 = vmatpush.msra.mxu0 %v1352
    %v1354 = vand.u32 %v1111, 4294901760
    %1355 = vmatpush.msra.mxu0 %v1354
    %v1356 = vand.u32 %v1110, 4294901760
    %1357 = vmatpush.msra.mxu0 %v1356
    %v1358 = vand.u32 %v1109, 4294901760
    %v1359 = vsub.f32 %v1109, %v1358
    %v1360 = vand.u32 %v1359, 4294901760
    %1361 = vmatmul.f32.gmra.mxu0 %v1360
    %v1362 = vpop.f32.mrf.mxu0
    %v1363 = vadd.f32 %v1324, %v1362
    %1364 = vdwg.mxu0
    %v1365 = vand.u32 %v1125, 4294901760
    %v1366 = vsub.f32 %v1125, %v1365
    %v1367 = vand.u32 %v1366, 4294901760
    %1368 = vmatpush.msra.mxu0 %v1367
    %v1369 = vand.u32 %v1124, 4294901760
    %v1370 = vsub.f32 %v1124, %v1369
    %v1371 = vand.u32 %v1370, 4294901760
    %1372 = vmatpush.msra.mxu0 %v1371
    %v1373 = vand.u32 %v1123, 4294901760
    %v1374 = vsub.f32 %v1123, %v1373
    %v1375 = vand.u32 %v1374, 4294901760
    %1376 = vmatpush.msra.mxu0 %v1375
    %v1377 = vand.u32 %v1122, 4294901760
    %v1378 = vsub.f32 %v1122, %v1377
    %v1379 = vand.u32 %v1378, 4294901760
    %1380 = vmatpush.msra.mxu0 %v1379
    %v1381 = vand.u32 %v1121, 4294901760
    %v1382 = vsub.f32 %v1121, %v1381
    %v1383 = vand.u32 %v1382, 4294901760
    %1384 = vmatpush.msra.mxu0 %v1383
    %v1385 = vand.u32 %v1120, 4294901760
    %v1386 = vsub.f32 %v1120, %v1385
    %v1387 = vand.u32 %v1386, 4294901760
    %1388 = vmatpush.msra.mxu0 %v1387
    %v1389 = vand.u32 %v1119, 4294901760
    %v1390 = vsub.f32 %v1119, %v1389
    %v1391 = vand.u32 %v1390, 4294901760
    %1392 = vmatpush.msra.mxu0 %v1391
    %v1393 = vand.u32 %v1118, 4294901760
    %v1394 = vsub.f32 %v1118, %v1393
    %v1395 = vand.u32 %v1394, 4294901760
    %1396 = vmatpush.msra.mxu0 %v1395
    %v1397 = vand.u32 %v1117, 4294901760
    %v1398 = vsub.f32 %v1117, %v1397
    %v1399 = vand.u32 %v1398, 4294901760
    %1400 = vmatpush.msra.mxu0 %v1399
    %v1401 = vand.u32 %v1116, 4294901760
    %v1402 = vsub.f32 %v1116, %v1401
    %v1403 = vand.u32 %v1402, 4294901760
    %1404 = vmatpush.msra.mxu0 %v1403
    %v1405 = vand.u32 %v1115, 4294901760
    %v1406 = vsub.f32 %v1115, %v1405
    %v1407 = vand.u32 %v1406, 4294901760
    %1408 = vmatpush.msra.mxu0 %v1407
    %v1409 = vand.u32 %v1114, 4294901760
    %v1410 = vsub.f32 %v1114, %v1409
    %v1411 = vand.u32 %v1410, 4294901760
    %1412 = vmatpush.msra.mxu0 %v1411
    %v1413 = vand.u32 %v1113, 4294901760
    %v1414 = vsub.f32 %v1113, %v1413
    %v1415 = vand.u32 %v1414, 4294901760
    %1416 = vmatpush.msra.mxu0 %v1415
    %v1417 = vand.u32 %v1112, 4294901760
    %v1418 = vsub.f32 %v1112, %v1417
    %v1419 = vand.u32 %v1418, 4294901760
    %1420 = vmatpush.msra.mxu0 %v1419
    %v1421 = vand.u32 %v1111, 4294901760
    %v1422 = vsub.f32 %v1111, %v1421
    %v1423 = vand.u32 %v1422, 4294901760
    %1424 = vmatpush.msra.mxu0 %v1423
    %v1425 = vand.u32 %v1110, 4294901760
    %v1426 = vsub.f32 %v1110, %v1425
    %v1427 = vand.u32 %v1426, 4294901760
    %1428 = vmatpush.msra.mxu0 %v1427
    %v1429 = vand.u32 %v1109, 4294901760
    %1430 = vmatmul.f32.gmra.mxu0 %v1429
    %v1431 = vpop.f32.mrf.mxu0
    %v1432 = vadd.f32 %v1363, %v1431
    %1433 = vdwg.mxu0
    %v1434 = vand.u32 %v1125, 4294901760
    %1435 = vmatpush.msra.mxu0 %v1434
    %v1436 = vand.u32 %v1124, 4294901760
    %1437 = vmatpush.msra.mxu0 %v1436
    %v1438 = vand.u32 %v1123, 4294901760
    %1439 = vmatpush.msra.mxu0 %v1438
    %v1440 = vand.u32 %v1122, 4294901760
    %1441 = vmatpush.msra.mxu0 %v1440
    %v1442 = vand.u32 %v1121, 4294901760
    %1443 = vmatpush.msra.mxu0 %v1442
    %v1444 = vand.u32 %v1120, 4294901760
    %1445 = vmatpush.msra.mxu0 %v1444
    %v1446 = vand.u32 %v1119, 4294901760
    %1447 = vmatpush.msra.mxu0 %v1446
    %v1448 = vand.u32 %v1118, 4294901760
    %1449 = vmatpush.msra.mxu0 %v1448
    %v1450 = vand.u32 %v1117, 4294901760
    %1451 = vmatpush.msra.mxu0 %v1450
    %v1452 = vand.u32 %v1116, 4294901760
    %1453 = vmatpush.msra.mxu0 %v1452
    %v1454 = vand.u32 %v1115, 4294901760
    %1455 = vmatpush.msra.mxu0 %v1454
    %v1456 = vand.u32 %v1114, 4294901760
    %1457 = vmatpush.msra.mxu0 %v1456
    %v1458 = vand.u32 %v1113, 4294901760
    %1459 = vmatpush.msra.mxu0 %v1458
    %v1460 = vand.u32 %v1112, 4294901760
    %1461 = vmatpush.msra.mxu0 %v1460
    %v1462 = vand.u32 %v1111, 4294901760
    %1463 = vmatpush.msra.mxu0 %v1462
    %v1464 = vand.u32 %v1110, 4294901760
    %1465 = vmatpush.msra.mxu0 %v1464
    %v1466 = vand.u32 %v1109, 4294901760
    %1467 = vmatmul.f32.gmra.mxu0 %v1466
    %v1468 = vpop.f32.mrf.mxu0
    %v1469 = vadd.f32 %v1432, %v1468
    %1470 = vdwg.mxu0
    %v1471 = vmax.f32 %v1469, 0.0
    %v1472 = vld [vmem:[%s9] sm:$0xff]
    %v1473 = vld [vmem:[%s9 + $0x8] sm:$0xff]
    %v1474 = vld [vmem:[%s9 + $0x10] sm:$0xff]
    %v1475 = vld [vmem:[%s9 + $0x18] sm:$0xff]
    %v1476 = vld [vmem:[%s9 + $0x20] sm:$0xff]
    %v1477 = vld [vmem:[%s9 + $0x28] sm:$0xff]
    %v1478 = vld [vmem:[%s9 + $0x30] sm:$0xff]
    %v1479 = vld [vmem:[%s9 + $0x38] sm:$0xff]
    %v1480 = vld [vmem:[%s9 + $0x40] sm:$0xff]
    %v1481 = vld [vmem:[%s9 + $0x48] sm:$0xff]
    %v1482 = vld [vmem:[%s9 + $0x50] sm:$0xff]
    %v1483 = vld [vmem:[%s9 + $0x58] sm:$0xff]
    %v1484 = vld [vmem:[%s9 + $0x60] sm:$0xff]
    %v1485 = vld [vmem:[%s9 + $0x68] sm:$0xff]
    %v1486 = vld [vmem:[%s9 + $0x70] sm:$0xff]
    %v1487 = vld [vmem:[%s9 + $0x78] sm:$0xff]
    %v1488 = vld [vmem:[%s10] sm:$0x1]
    %v1490 = vperm.slane %v1488, 0
    %v1492 = vand.u32 %v1487, 4294901760
    %1493 = vmatpush.msra.mxu0 %v1492
    %v1494 = vand.u32 %v1486, 4294901760
    %1495 = vmatpush.msra.mxu0 %v1494
    %v1496 = vand.u32 %v1485, 4294901760
    %1497 = vmatpush.msra.mxu0 %v1496
    %v1498 = vand.u32 %v1484, 4294901760
    %1499 = vmatpush.msra.mxu0 %v1498
    %v1500 = vand.u32 %v1483, 4294901760
    %1501 = vmatpush.msra.mxu0 %v1500
    %v1502 = vand.u32 %v1482, 4294901760
    %1503 = vmatpush.msra.mxu0 %v1502
    %v1504 = vand.u32 %v1481, 4294901760
    %1505 = vmatpush.msra.mxu0 %v1504
    %v1506 = vand.u32 %v1480, 4294901760
    %1507 = vmatpush.msra.mxu0 %v1506
    %v1508 = vand.u32 %v1479, 4294901760
    %1509 = vmatpush.msra.mxu0 %v1508
    %v1510 = vand.u32 %v1478, 4294901760
    %1511 = vmatpush.msra.mxu0 %v1510
    %v1512 = vand.u32 %v1477, 4294901760
    %1513 = vmatpush.msra.mxu0 %v1512
    %v1514 = vand.u32 %v1476, 4294901760
    %1515 = vmatpush.msra.mxu0 %v1514
    %v1516 = vand.u32 %v1475, 4294901760
    %1517 = vmatpush.msra.mxu0 %v1516
    %v1518 = vand.u32 %v1474, 4294901760
    %1519 = vmatpush.msra.mxu0 %v1518
    %v1520 = vand.u32 %v1473, 4294901760
    %1521 = vmatpush.msra.mxu0 %v1520
    %v1522 = vand.u32 %v1472, 4294901760
    %1523 = vmatpush.msra.mxu0 %v1522
    %v1524 = vand.u32 %v1471, 4294901760
    %v1525 = vsub.f32 %v1471, %v1524
    %v1526 = vand.u32 %v1525, 4294901760
    %v1527 = vsub.f32 %v1525, %v1526
    %v1528 = vand.u32 %v1527, 4294901760
    %1529 = vmatmul.f32.gmra.mxu0 %v1528
    %v1530 = vpop.f32.mrf.mxu0
    %v1531 = vadd.f32 %v1490, %v1530
    %1532 = vdwg.mxu0
    %v1533 = vand.u32 %v1487, 4294901760
    %v1534 = vsub.f32 %v1487, %v1533
    %v1535 = vand.u32 %v1534, 4294901760
    %v1536 = vsub.f32 %v1534, %v1535
    %v1537 = vand.u32 %v1536, 4294901760
    %1538 = vmatpush.msra.mxu0 %v1537
    %v1539 = vand.u32 %v1486, 4294901760
    %v1540 = vsub.f32 %v1486, %v1539
    %v1541 = vand.u32 %v1540, 4294901760
    %v1542 = vsub.f32 %v1540, %v1541
    %v1543 = vand.u32 %v1542, 4294901760
    %1544 = vmatpush.msra.mxu0 %v1543
    %v1545 = vand.u32 %v1485, 4294901760
    %v1546 = vsub.f32 %v1485, %v1545
    %v1547 = vand.u32 %v1546, 4294901760
    %v1548 = vsub.f32 %v1546, %v1547
    %v1549 = vand.u32 %v1548, 4294901760
    %1550 = vmatpush.msra.mxu0 %v1549
    %v1551 = vand.u32 %v1484, 4294901760
    %v1552 = vsub.f32 %v1484, %v1551
    %v1553 = vand.u32 %v1552, 4294901760
    %v1554 = vsub.f32 %v1552, %v1553
    %v1555 = vand.u32 %v1554, 4294901760
    %1556 = vmatpush.msra.mxu0 %v1555
    %v1557 = vand.u32 %v1483, 4294901760
    %v1558 = vsub.f32 %v1483, %v1557
    %v1559 = vand.u32 %v1558, 4294901760
    %v1560 = vsub.f32 %v1558, %v1559
    %v1561 = vand.u32 %v1560, 4294901760
    %1562 = vmatpush.msra.mxu0 %v1561
    %v1563 = vand.u32 %v1482, 4294901760
    %v1564 = vsub.f32 %v1482, %v1563
    %v1565 = vand.u32 %v1564, 4294901760
    %v1566 = vsub.f32 %v1564, %v1565
    %v1567 = vand.u32 %v1566, 4294901760
    %1568 = vmatpush.msra.mxu0 %v1567
    %v1569 = vand.u32 %v1481, 4294901760
    %v1570 = vsub.f32 %v1481, %v1569
    %v1571 = vand.u32 %v1570, 4294901760
    %v1572 = vsub.f32 %v1570, %v1571
    %v1573 = vand.u32 %v1572, 4294901760
    %1574 = vmatpush.msra.mxu0 %v1573
    %v1575 = vand.u32 %v1480, 4294901760
    %v1576 = vsub.f32 %v1480, %v1575
    %v1577 = vand.u32 %v1576, 4294901760
    %v1578 = vsub.f32 %v1576, %v1577
    %v1579 = vand.u32 %v1578, 4294901760
    %1580 = vmatpush.msra.mxu0 %v1579
    %v1581 = vand.u32 %v1479, 4294901760
    %v1582 = vsub.f32 %v1479, %v1581
    %v1583 = vand.u32 %v1582, 4294901760
    %v1584 = vsub.f32 %v1582, %v1583
    %v1585 = vand.u32 %v1584, 4294901760
    %1586 = vmatpush.msra.mxu0 %v1585
    %v1587 = vand.u32 %v1478, 4294901760
    %v1588 = vsub.f32 %v1478, %v1587
    %v1589 = vand.u32 %v1588, 4294901760
    %v1590 = vsub.f32 %v1588, %v1589
    %v1591 = vand.u32 %v1590, 4294901760
    %1592 = vmatpush.msra.mxu0 %v1591
    %v1593 = vand.u32 %v1477, 4294901760
    %v1594 = vsub.f32 %v1477, %v1593
    %v1595 = vand.u32 %v1594, 4294901760
    %v1596 = vsub.f32 %v1594, %v1595
    %v1597 = vand.u32 %v1596, 4294901760
    %1598 = vmatpush.msra.mxu0 %v1597
    %v1599 = vand.u32 %v1476, 4294901760
    %v1600 = vsub.f32 %v1476, %v1599
    %v1601 = vand.u32 %v1600, 4294901760
    %v1602 = vsub.f32 %v1600, %v1601
    %v1603 = vand.u32 %v1602, 4294901760
    %1604 = vmatpush.msra.mxu0 %v1603
    %v1605 = vand.u32 %v1475, 4294901760
    %v1606 = vsub.f32 %v1475, %v1605
    %v1607 = vand.u32 %v1606, 4294901760
    %v1608 = vsub.f32 %v1606, %v1607
    %v1609 = vand.u32 %v1608, 4294901760
    %1610 = vmatpush.msra.mxu0 %v1609
    %v1611 = vand.u32 %v1474, 4294901760
    %v1612 = vsub.f32 %v1474, %v1611
    %v1613 = vand.u32 %v1612, 4294901760
    %v1614 = vsub.f32 %v1612, %v1613
    %v1615 = vand.u32 %v1614, 4294901760
    %1616 = vmatpush.msra.mxu0 %v1615
    %v1617 = vand.u32 %v1473, 4294901760
    %v1618 = vsub.f32 %v1473, %v1617
    %v1619 = vand.u32 %v1618, 4294901760
    %v1620 = vsub.f32 %v1618, %v1619
    %v1621 = vand.u32 %v1620, 4294901760
    %1622 = vmatpush.msra.mxu0 %v1621
    %v1623 = vand.u32 %v1472, 4294901760
    %v1624 = vsub.f32 %v1472, %v1623
    %v1625 = vand.u32 %v1624, 4294901760
    %v1626 = vsub.f32 %v1624, %v1625
    %v1627 = vand.u32 %v1626, 4294901760
    %1628 = vmatpush.msra.mxu0 %v1627
    %v1629 = vand.u32 %v1471, 4294901760
    %1630 = vmatmul.f32.gmra.mxu0 %v1629
    %v1631 = vpop.f32.mrf.mxu0
    %v1632 = vadd.f32 %v1531, %v1631
    %1633 = vdwg.mxu0
    %v1634 = vand.u32 %v1487, 4294901760
    %v1635 = vsub.f32 %v1487, %v1634
    %1636 = vmatpush.msra.mxu0 %v1635
    %v1637 = vand.u32 %v1486, 4294901760
    %v1638 = vsub.f32 %v1486, %v1637
    %1639 = vmatpush.msra.mxu0 %v1638
    %v1640 = vand.u32 %v1485, 4294901760
    %v1641 = vsub.f32 %v1485, %v1640
    %1642 = vmatpush.msra.mxu0 %v1641
    %v1643 = vand.u32 %v1484, 4294901760
    %v1644 = vsub.f32 %v1484, %v1643
    %1645 = vmatpush.msra.mxu0 %v1644
    %v1646 = vand.u32 %v1483, 4294901760
    %v1647 = vsub.f32 %v1483, %v1646
    %1648 = vmatpush.msra.mxu0 %v1647
    %v1649 = vand.u32 %v1482, 4294901760
    %v1650 = vsub.f32 %v1482, %v1649
    %1651 = vmatpush.msra.mxu0 %v1650
    %v1652 = vand.u32 %v1481, 4294901760
    %v1653 = vsub.f32 %v1481, %v1652
    %1654 = vmatpush.msra.mxu0 %v1653
    %v1655 = vand.u32 %v1480, 4294901760
    %v1656 = vsub.f32 %v1480, %v1655
    %1657 = vmatpush.msra.mxu0 %v1656
    %v1658 = vand.u32 %v1479, 4294901760
    %v1659 = vsub.f32 %v1479, %v1658
    %1660 = vmatpush.msra.mxu0 %v1659
    %v1661 = vand.u32 %v1478, 4294901760
    %v1662 = vsub.f32 %v1478, %v1661
    %1663 = vmatpush.msra.mxu0 %v1662
    %v1664 = vand.u32 %v1477, 4294901760
    %v1665 = vsub.f32 %v1477, %v1664
    %1666 = vmatpush.msra.mxu0 %v1665
    %v1667 = vand.u32 %v1476, 4294901760
    %v1668 = vsub.f32 %v1476, %v1667
    %1669 = vmatpush.msra.mxu0 %v1668
    %v1670 = vand.u32 %v1475, 4294901760
    %v1671 = vsub.f32 %v1475, %v1670
    %1672 = vmatpush.msra.mxu0 %v1671
    %v1673 = vand.u32 %v1474, 4294901760
    %v1674 = vsub.f32 %v1474, %v1673
    %1675 = vmatpush.msra.mxu0 %v1674
    %v1676 = vand.u32 %v1473, 4294901760
    %v1677 = vsub.f32 %v1473, %v1676
    %1678 = vmatpush.msra.mxu0 %v1677
    %v1679 = vand.u32 %v1472, 4294901760
    %v1680 = vsub.f32 %v1472, %v1679
    %1681 = vmatpush.msra.mxu0 %v1680
    %v1682 = vand.u32 %v1471, 4294901760
    %v1683 = vsub.f32 %v1471, %v1682
    %1684 = vmatmul.f32.gmra.mxu0 %v1683
    %v1685 = vpop.f32.mrf.mxu0
    %v1686 = vadd.f32 %v1632, %v1685
    %1687 = vdwg.mxu0
    %v1688 = vand.u32 %v1487, 4294901760
    %1689 = vmatpush.msra.mxu0 %v1688
    %v1690 = vand.u32 %v1486, 4294901760
    %1691 = vmatpush.msra.mxu0 %v1690
    %v1692 = vand.u32 %v1485, 4294901760
    %1693 = vmatpush.msra.mxu0 %v1692
    %v1694 = vand.u32 %v1484, 4294901760
    %1695 = vmatpush.msra.mxu0 %v1694
    %v1696 = vand.u32 %v1483, 4294901760
    %1697 = vmatpush.msra.mxu0 %v1696
    %v1698 = vand.u32 %v1482, 4294901760
    %1699 = vmatpush.msra.mxu0 %v1698
    %v1700 = vand.u32 %v1481, 4294901760
    %1701 = vmatpush.msra.mxu0 %v1700
    %v1702 = vand.u32 %v1480, 4294901760
    %1703 = vmatpush.msra.mxu0 %v1702
    %v1704 = vand.u32 %v1479, 4294901760
    %1705 = vmatpush.msra.mxu0 %v1704
    %v1706 = vand.u32 %v1478, 4294901760
    %1707 = vmatpush.msra.mxu0 %v1706
    %v1708 = vand.u32 %v1477, 4294901760
    %1709 = vmatpush.msra.mxu0 %v1708
    %v1710 = vand.u32 %v1476, 4294901760
    %1711 = vmatpush.msra.mxu0 %v1710
    %v1712 = vand.u32 %v1475, 4294901760
    %1713 = vmatpush.msra.mxu0 %v1712
    %v1714 = vand.u32 %v1474, 4294901760
    %1715 = vmatpush.msra.mxu0 %v1714
    %v1716 = vand.u32 %v1473, 4294901760
    %1717 = vmatpush.msra.mxu0 %v1716
    %v1718 = vand.u32 %v1472, 4294901760
    %1719 = vmatpush.msra.mxu0 %v1718
    %v1720 = vand.u32 %v1471, 4294901760
    %v1721 = vsub.f32 %v1471, %v1720
    %v1722 = vand.u32 %v1721, 4294901760
    %1723 = vmatmul.f32.gmra.mxu0 %v1722
    %v1724 = vpop.f32.mrf.mxu0
    %v1725 = vadd.f32 %v1686, %v1724
    %1726 = vdwg.mxu0
    %v1727 = vand.u32 %v1487, 4294901760
    %v1728 = vsub.f32 %v1487, %v1727
    %v1729 = vand.u32 %v1728, 4294901760
    %1730 = vmatpush.msra.mxu0 %v1729
    %v1731 = vand.u32 %v1486, 4294901760
    %v1732 = vsub.f32 %v1486, %v1731
    %v1733 = vand.u32 %v1732, 4294901760
    %1734 = vmatpush.msra.mxu0 %v1733
    %v1735 = vand.u32 %v1485, 4294901760
    %v1736 = vsub.f32 %v1485, %v1735
    %v1737 = vand.u32 %v1736, 4294901760
    %1738 = vmatpush.msra.mxu0 %v1737
    %v1739 = vand.u32 %v1484, 4294901760
    %v1740 = vsub.f32 %v1484, %v1739
    %v1741 = vand.u32 %v1740, 4294901760
    %1742 = vmatpush.msra.mxu0 %v1741
    %v1743 = vand.u32 %v1483, 4294901760
    %v1744 = vsub.f32 %v1483, %v1743
    %v1745 = vand.u32 %v1744, 4294901760
    %1746 = vmatpush.msra.mxu0 %v1745
    %v1747 = vand.u32 %v1482, 4294901760
    %v1748 = vsub.f32 %v1482, %v1747
    %v1749 = vand.u32 %v1748, 4294901760
    %1750 = vmatpush.msra.mxu0 %v1749
    %v1751 = vand.u32 %v1481, 4294901760
    %v1752 = vsub.f32 %v1481, %v1751
    %v1753 = vand.u32 %v1752, 4294901760
    %1754 = vmatpush.msra.mxu0 %v1753
    %v1755 = vand.u32 %v1480, 4294901760
    %v1756 = vsub.f32 %v1480, %v1755
    %v1757 = vand.u32 %v1756, 4294901760
    %1758 = vmatpush.msra.mxu0 %v1757
    %v1759 = vand.u32 %v1479, 4294901760
    %v1760 = vsub.f32 %v1479, %v1759
    %v1761 = vand.u32 %v1760, 4294901760
    %1762 = vmatpush.msra.mxu0 %v1761
    %v1763 = vand.u32 %v1478, 4294901760
    %v1764 = vsub.f32 %v1478, %v1763
    %v1765 = vand.u32 %v1764, 4294901760
    %1766 = vmatpush.msra.mxu0 %v1765
    %v1767 = vand.u32 %v1477, 4294901760
    %v1768 = vsub.f32 %v1477, %v1767
    %v1769 = vand.u32 %v1768, 4294901760
    %1770 = vmatpush.msra.mxu0 %v1769
    %v1771 = vand.u32 %v1476, 4294901760
    %v1772 = vsub.f32 %v1476, %v1771
    %v1773 = vand.u32 %v1772, 4294901760
    %1774 = vmatpush.msra.mxu0 %v1773
    %v1775 = vand.u32 %v1475, 4294901760
    %v1776 = vsub.f32 %v1475, %v1775
    %v1777 = vand.u32 %v1776, 4294901760
    %1778 = vmatpush.msra.mxu0 %v1777
    %v1779 = vand.u32 %v1474, 4294901760
    %v1780 = vsub.f32 %v1474, %v1779
    %v1781 = vand.u32 %v1780, 4294901760
    %1782 = vmatpush.msra.mxu0 %v1781
    %v1783 = vand.u32 %v1473, 4294901760
    %v1784 = vsub.f32 %v1473, %v1783
    %v1785 = vand.u32 %v1784, 4294901760
    %1786 = vmatpush.msra.mxu0 %v1785
    %v1787 = vand.u32 %v1472, 4294901760
    %v1788 = vsub.f32 %v1472, %v1787
    %v1789 = vand.u32 %v1788, 4294901760
    %1790 = vmatpush.msra.mxu0 %v1789
    %v1791 = vand.u32 %v1471, 4294901760
    %1792 = vmatmul.f32.gmra.mxu0 %v1791
    %v1793 = vpop.f32.mrf.mxu0
    %v1794 = vadd.f32 %v1725, %v1793
    %1795 = vdwg.mxu0
    %v1796 = vand.u32 %v1487, 4294901760
    %1797 = vmatpush.msra.mxu0 %v1796
    %v1798 = vand.u32 %v1486, 4294901760
    %1799 = vmatpush.msra.mxu0 %v1798
    %v1800 = vand.u32 %v1485, 4294901760
    %1801 = vmatpush.msra.mxu0 %v1800
    %v1802 = vand.u32 %v1484, 4294901760
    %1803 = vmatpush.msra.mxu0 %v1802
    %v1804 = vand.u32 %v1483, 4294901760
    %1805 = vmatpush.msra.mxu0 %v1804
    %v1806 = vand.u32 %v1482, 4294901760
    %1807 = vmatpush.msra.mxu0 %v1806
    %v1808 = vand.u32 %v1481, 4294901760
    %1809 = vmatpush.msra.mxu0 %v1808
    %v1810 = vand.u32 %v1480, 4294901760
    %1811 = vmatpush.msra.mxu0 %v1810
    %v1812 = vand.u32 %v1479, 4294901760
    %1813 = vmatpush.msra.mxu0 %v1812
    %v1814 = vand.u32 %v1478, 4294901760
    %1815 = vmatpush.msra.mxu0 %v1814
    %v1816 = vand.u32 %v1477, 4294901760
    %1817 = vmatpush.msra.mxu0 %v1816
    %v1818 = vand.u32 %v1476, 4294901760
    %1819 = vmatpush.msra.mxu0 %v1818
    %v1820 = vand.u32 %v1475, 4294901760
    %1821 = vmatpush.msra.mxu0 %v1820
    %v1822 = vand.u32 %v1474, 4294901760
    %1823 = vmatpush.msra.mxu0 %v1822
    %v1824 = vand.u32 %v1473, 4294901760
    %1825 = vmatpush.msra.mxu0 %v1824
    %v1826 = vand.u32 %v1472, 4294901760
    %1827 = vmatpush.msra.mxu0 %v1826
    %v1828 = vand.u32 %v1471, 4294901760
    %1829 = vmatmul.f32.gmra.mxu0 %v1828
    %v1830 = vpop.f32.mrf.mxu0
    %v1831 = vadd.f32 %v1794, %v1830
    %1832 = vdwg.mxu0
    %vm1833 = vcmask 15360
    %1834 = vst.msk [vmem:[%s11] sm:$0xff] %vm1833, %v1831
    // Predicated region
    $region62: #{tpu_custom_call.1} parent=1 // pred_check
      _
    $region63: #{tpu_custom_call.1} parent=1 // pred_check_branch
      %1836 = sbr.rel (0) target = $region65
    $region64: #{tpu_custom_call.1} parent=1 // pred_region
      _
    $region65: #{tpu_custom_call.1} parent=1 // pred_fallthru
      _
    // Predicated region
    $region66: #{tpu_custom_call.1} parent=1 // pred_check
      _
    $region67: #{tpu_custom_call.1} parent=1 // pred_check_branch
      %1838 = sbr.rel (0) target = $region69
    $region68: #{tpu_custom_call.1} parent=1 // pred_region
      _
    $region69: #{tpu_custom_call.1} parent=1 // pred_fallthru
      _
    %1839 = vsyncpa [#allocation3], 1
    %1840 = vsyncpa [#allocation5], 1
    %1841 = vsyncpa [#allocation8], 1

</llo_original>
